<compile_context>
chip_gen: v6e
topology: v6e:2x2x1
jax: 0.10.0
libtpu: 0.0.40
codegen_flags: <defaults>
</compile_context>

<pallas_src>
import functools
import math

import jax
import jax.numpy as jnp
from jax import lax
from jax.experimental import pallas as pl
from jax.experimental.pallas import tpu as pltpu


# ------------------------------- VMEM budget ---------------------------------

def _vmem_limit_bytes():
    """~75% of this chip's per-core VMEM (v5e/v6e: 128 MiB, v7x: 64 MiB)."""
    try:
        cap = pltpu.get_tpu_info().vmem_capacity_bytes
    except Exception:
        cap = 64 * 1024 * 1024          # conservative fallback (v7x per-core)
    return min(int(cap * 0.75), 100 * 1024 * 1024)


def _pick_tq(S, max_tq=256):
    """Largest divisor of S that is <= max_tq (amortizes per-step overhead)."""
    for t in range(min(S, max_tq), 0, -1):
        if S % t == 0:
            return t
    return S


# --------------------------- Fused attention kernel --------------------------

def _fused_mha_kernel(q_ref, k_ref, v_ref, wqkv_ref, bqkv_ref, wo_ref, bo_ref,
                      o_ref, k_scr, v_scr, ctx_scr, *, num_heads, compute_dtype):
    """One (batch, query-tile) grid step: QKV proj + attention + out proj."""
    tq = q_ref.shape[1]                  # query rows in this tile
    D = q_ref.shape[2]                   # d_model
    d_k = D // num_heads
    scale = 1.0 / math.sqrt(d_k)
    cd = compute_dtype

    wqkv = wqkv_ref[...]                 # (D, 3D)  already compute_dtype
    bqkv = bqkv_ref[...]                 # (1, 3D)  f32

    # K/V projection: done ONCE per batch element (query-tile axis is
    # "arbitrary", so the scratch persists across qi for this batch).
    @pl.when(pl.program_id(1) == 0)
    def _project_kv():
        xk = k_ref[0].astype(cd)         # (S, D)
        xv = v_ref[0].astype(cd)
        k = jnp.dot(xk, wqkv[:, D:2 * D], preferred_element_type=jnp.float32)
        v = jnp.dot(xv, wqkv[:, 2 * D:], preferred_element_type=jnp.float32)
        k = k + bqkv[:, D:2 * D].astype(jnp.float32)
        v = v + bqkv[:, 2 * D:].astype(jnp.float32)
        k_scr[...] = k.astype(cd)
        v_scr[...] = v.astype(cd)

    # Q projection for this query tile (1/sqrt(d_k) folded in, cast once).
    xq = q_ref[0].astype(cd)             # (tq, D)
    q = jnp.dot(xq, wqkv[:, :D], preferred_element_type=jnp.float32)
    q = (q + bqkv[:, :D].astype(jnp.float32)) * scale
    q = q.astype(cd)                     # single cast; no per-head casts below
    k = k_scr[...]                       # (S, D) compute_dtype
    v = v_scr[...]

    # Per-head attention.  Each head's context is written into its column slice
    # of a (tq, D) VMEM slab so the head merge + output projection becomes ONE
    # full-depth (tq, D) @ (D, D) matmul after the loop.
    for hi in range(num_heads):
        cols = slice(hi * d_k, (hi + 1) * d_k)
        scores = lax.dot_general(q[:, cols], k[:, cols],
                                 (((1,), (1,)), ((), ())),
                                 preferred_element_type=jnp.float32)  # (tq, S)
        m = jnp.max(scores, axis=-1, keepdims=True)
        e = jnp.exp(scores - m)
        denom = jnp.sum(e, axis=-1, keepdims=True)
        p = e * pl.reciprocal(denom, approx=True)                     # (tq, S)
        # TODO(synk): dropout(p_attn, p=0.1) is an eval-mode no-op.
        ctx = jnp.dot(p.astype(cd), v[:, cols],
                      preferred_element_type=jnp.float32)             # (tq, d_k)
        ctx_scr[:, cols] = ctx

    out = jnp.dot(ctx_scr[...].astype(cd), wo_ref[...],
                  preferred_element_type=jnp.float32)                 # (tq, D)
    out = out + bo_ref[...].astype(jnp.float32)
    o_ref[0] = out.astype(o_ref.dtype)


# ------------------------------- LayerNorm kernel ----------------------------

def _layer_norm_kernel(x_ref, a_ref, b_ref, o_ref, *, eps):
    """Spec LayerNorm: a_2 * (x - mean) / (std + eps) + b_2, std unbiased."""
    x = x_ref[0].astype(jnp.float32)                       # (tq, D)
    n = x.shape[-1]
    mean = jnp.mean(x, axis=-1, keepdims=True)
    xc = x - mean
    std = jnp.sqrt(jnp.sum(xc * xc, axis=-1, keepdims=True) / (n - 1))
    y = a_ref[...].astype(jnp.float32) * xc / (std + eps) \
        + b_ref[...].astype(jnp.float32)
    o_ref[0] = y.astype(o_ref.dtype)


# ------------------------------- Module wrappers ------------------------------

def init_params(key, d_model, dtype=jnp.float32):
    """4 Linear(d_model, d_model) layers; q/k/v weights stored fused (D, 3D)."""
    keys = jax.random.split(key, 8)
    bound = 1.0 / math.sqrt(d_model)     # PyTorch nn.Linear default init range
    ws, bs = [], []
    for i in range(4):
        ws.append(jax.random.uniform(keys[2 * i], (d_model, d_model),
                                     minval=-bound, maxval=bound, dtype=dtype))
        bs.append(jax.random.uniform(keys[2 * i + 1], (d_model,),
                                     minval=-bound, maxval=bound, dtype=dtype))
    wqkv = jnp.concatenate(ws[:3], axis=1)                        # (D, 3D)
    bqkv = jnp.concatenate(bs[:3], axis=0).reshape(1, 3 * d_model)
    wo = ws[3]                                                    # (D, D)
    bo = bs[3].reshape(1, d_model)                                # (1, D)
    return wqkv, bqkv, wo, bo


def multi_headed_attention(params, h, query, key, value, mask=None,
                           compute_dtype=jnp.bfloat16, tq=None):
    """query/key/value: (B, S, d_model) -> (B, S, d_model)."""
    assert mask is None  # TODO(synk): mask path not implemented for this run
    wqkv, bqkv, wo, bo = params
    B, S, D = query.shape
    assert D % h == 0

    if tq is None:
        tq = _pick_tq(S)
    assert S % tq == 0
    grid = (B, S // tq)
    cd = compute_dtype

    kernel = functools.partial(_fused_mha_kernel, num_heads=h, compute_dtype=cd)

    # NOTE: weight / key / value block indices are grid-invariant (or batch-only),
    # so Pallas skips their re-DMA when the block index repeats.
    # TODO(synk): single-buffer grid-invariant operands (pipeline_mode=
    #             pl.Buffered(1)) to halve their VMEM footprint on v7x.
    return pl.pallas_call(
        kernel,
        out_shape=jax.ShapeDtypeStruct((B, S, D), query.dtype),
        grid=grid,
        in_specs=[
            pl.BlockSpec((1, tq, D), lambda b, qi: (b, qi, 0)),    # query tile
            pl.BlockSpec((1, S, D), lambda b, qi: (b, 0, 0)),      # key (full S)
            pl.BlockSpec((1, S, D), lambda b, qi: (b, 0, 0)),      # value (full S)
            pl.BlockSpec((D, 3 * D), lambda b, qi: (0, 0)),        # fused QKV W
            pl.BlockSpec((1, 3 * D), lambda b, qi: (0, 0)),        # fused QKV b
            pl.BlockSpec((D, D), lambda b, qi: (0, 0)),            # output W
            pl.BlockSpec((1, D), lambda b, qi: (0, 0)),            # output b
        ],
        out_specs=pl.BlockSpec((1, tq, D), lambda b, qi: (b, qi, 0)),
        scratch_shapes=[
            pltpu.VMEM((S, D), cd),            # projected K (persists over qi)
            pltpu.VMEM((S, D), cd),            # projected V (persists over qi)
            pltpu.VMEM((tq, D), jnp.float32),  # merged per-head contexts
        ],
        # Batch axis parallel (megacore / v7x 2-TC sharding); query-tile axis
        # must be sequential so the K/V scratch written at qi==0 is reused.
        # NOTE: with B == 1 one v7x TensorCore idles; needs B >= 2 grid units.
        compiler_params=pltpu.CompilerParams(
            dimension_semantics=("parallel", "arbitrary"),
            vmem_limit_bytes=_vmem_limit_bytes(),
        ),
    )(query, key, value, wqkv.astype(cd), bqkv, wo.astype(cd), bo)


def layer_norm(x, a_2, b_2, eps=1e-6, tq=None):
    B, S, D = x.shape
    if tq is None:
        tq = _pick_tq(S)
    grid = (B, S // tq)
    return pl.pallas_call(
        functools.partial(_layer_norm_kernel, eps=eps),
        out_shape=jax.ShapeDtypeStruct((B, S, D), x.dtype),
        grid=grid,
        in_specs=[
            pl.BlockSpec((1, tq, D), lambda b, qi: (b, qi, 0)),
            pl.BlockSpec((1, D), lambda b, qi: (0, 0)),
            pl.BlockSpec((1, D), lambda b, qi: (0, 0)),
        ],
        out_specs=pl.BlockSpec((1, tq, D), lambda b, qi: (b, qi, 0)),
        compiler_params=pltpu.CompilerParams(
            dimension_semantics=("parallel", "parallel"),
            vmem_limit_bytes=_vmem_limit_bytes(),
        ),
    )(x, a_2.reshape(1, D), b_2.reshape(1, D))


def init_encoder_params(key, d_model, h, n_layers, dtype=jnp.float32):
    # clones() deep-copies ONE layer, so all N layers share identical weights.
    return dict(mha=init_params(key, d_model, dtype), h=h, n_layers=n_layers,
                ln_a=jnp.ones((d_model,), dtype), ln_b=jnp.zeros((d_model,), dtype))


def encoder_forward(params, x, mask=None, compute_dtype=jnp.bfloat16):
    """Encoder.forward: x through N (identical) layers, then LayerNorm."""
    for _ in range(params["n_layers"]):
        x = multi_headed_attention(params["mha"], params["h"], x, x, x,
                                   mask=mask, compute_dtype=compute_dtype)
    return layer_norm(x, params["ln_a"], params["ln_b"])


# ----------------------------- Pure-JAX references ----------------------------

def mha_reference(params, h, query, key, value):
    wqkv, bqkv, wo, bo = params
    B, S, D = query.shape
    d_k = D // h
    wq, wk, wv = wqkv[:, :D], wqkv[:, D:2 * D], wqkv[:, 2 * D:]
    bq, bk, bv = bqkv[0, :D], bqkv[0, D:2 * D], bqkv[0, 2 * D:]

    def proj(x, w, b):
        return (x @ w + b).reshape(B, S, h, d_k).transpose(0, 2, 1, 3)

    q, k, v = proj(query, wq, bq), proj(key, wk, bk), proj(value, wv, bv)
    scores = jnp.einsum("bhqd,bhkd->bhqk", q, k) / math.sqrt(d_k)
    p = jax.nn.softmax(scores, axis=-1)
    x = jnp.einsum("bhqk,bhkd->bhqd", p, v)
    x = x.transpose(0, 2, 1, 3).reshape(B, S, D)
    return x @ wo + bo[0]


def encoder_reference(params, x, eps=1e-6):
    for _ in range(params["n_layers"]):
        x = mha_reference(params["mha"], params["h"], x, x, x)
    D = x.shape[-1]
    mean = x.mean(-1, keepdims=True)
    xc = x - mean
    std = jnp.sqrt(jnp.sum(xc * xc, axis=-1, keepdims=True) / (D - 1))
    return params["ln_a"] * xc / (std + eps) + params["ln_b"]


# ----------------------------------- Main ------------------------------------

if __name__ == "__main__":
    B, S, d_model, h, n_layers = 2, 8, 32, 4, 2

    root = jax.random.PRNGKey(0)
    k_p, k_q, k_k, k_v, k_x, k_p2, k_q2 = jax.random.split(root, 7)

    # ---- single-layer MHA, toy shape ----
    params = init_params(k_p, d_model)
    query = jax.random.normal(k_q, (B, S, d_model), dtype=jnp.float32)
    key = jax.random.normal(k_k, (B, S, d_model), dtype=jnp.float32)
    value = jax.random.normal(k_v, (B, S, d_model), dtype=jnp.float32)
    ref = mha_reference(params, h, query, key, value)

    out_f32 = jax.block_until_ready(
        multi_headed_attention(params, h, query, key, value,
                               compute_dtype=jnp.float32))
    assert out_f32.shape == (B, S, d_model)
    assert jnp.allclose(out_f32, ref, atol=1e-2, rtol=1e-2), \
        float(jnp.max(jnp.abs(out_f32 - ref)))

    out_bf16 = jax.block_until_ready(
        multi_headed_attention(params, h, query, key, value))   # bf16 default
    assert jnp.allclose(out_bf16, ref, atol=1e-1, rtol=1e-1), \
        float(jnp.max(jnp.abs(out_bf16 - ref)))

    # ---- multi-query-tile shape (exercises persistent K/V scratch reuse) ----
    B2, S2, D2, h2 = 2, 256, 128, 4
    params2 = init_params(k_p2, D2)
    x2 = jax.random.normal(k_q2, (B2, S2, D2), dtype=jnp.float32)
    ref2 = mha_reference(params2, h2, x2, x2, x2)
    out2_f32 = jax.block_until_ready(
        multi_headed_attention(params2, h2, x2, x2, x2,
                               compute_dtype=jnp.float32, tq=128))
    assert jnp.allclose(out2_f32, ref2, atol=1e-2, rtol=1e-2), \
        float(jnp.max(jnp.abs(out2_f32 - ref2)))
    out2_bf16 = jax.block_until_ready(
        multi_headed_attention(params2, h2, x2, x2, x2, tq=128))
    assert jnp.allclose(out2_bf16, ref2, atol=1e-1, rtol=1e-1), \
        float(jnp.max(jnp.abs(out2_bf16 - ref2)))

    # ---- full Encoder: N identical layers + spec LayerNorm ----
    enc_params = init_encoder_params(k_p, d_model, h, n_layers)
    x = jax.random.normal(k_x, (B, S, d_model), dtype=jnp.float32)
    enc_ref = encoder_reference(enc_params, x)

    enc_f32 = jax.block_until_ready(
        encoder_forward(enc_params, x, compute_dtype=jnp.float32))
    assert enc_f32.shape == (B, S, d_model)
    assert jnp.allclose(enc_f32, enc_ref, atol=2e-2, rtol=2e-2), \
        float(jnp.max(jnp.abs(enc_f32 - enc_ref)))

    enc_bf16 = jax.block_until_ready(encoder_forward(enc_params, x))
    assert jnp.allclose(enc_bf16, enc_ref, atol=1.5e-1, rtol=1.5e-1), \
        float(jnp.max(jnp.abs(enc_bf16 - enc_ref)))

    print("KERNEL_OK")
</pallas_src>

<mosaic_0001>
module attributes {stable_mosaic.version = 11 : i64} {
  func.func @_fused_mha_kernel(%arg0: i32, %arg1: i32, %arg2: memref<1x8x32xf32, #tpu.memory_space<vmem>>, %arg3: memref<1x8x32xf32, #tpu.memory_space<vmem>>, %arg4: memref<1x8x32xf32, #tpu.memory_space<vmem>>, %arg5: memref<32x96xf32, #tpu.memory_space<vmem>>, %arg6: memref<1x96xf32, #tpu.memory_space<vmem>>, %arg7: memref<32x32xf32, #tpu.memory_space<vmem>>, %arg8: memref<1x32xf32, #tpu.memory_space<vmem>>, %arg9: memref<1x8x32xf32, #tpu.memory_space<vmem>>, %arg10: memref<8x32xf32, #tpu.memory_space<vmem>>, %arg11: memref<8x32xf32, #tpu.memory_space<vmem>>, %arg12: memref<8x32xf32, #tpu.memory_space<vmem>>) attributes {dimension_semantics = [#tpu.dimension_semantics<parallel>, #tpu.dimension_semantics<arbitrary>], iteration_bounds = array<i64: 2, 1>, scalar_prefetch = 0 : i64, scratch_operands = 3 : i64, tpu.core_type = #tpu.core_type<tc>, window_params = [{transform_indices = @transform_0, window_bounds = array<i64: 1, 8, 32>}, {transform_indices = @transform_1, window_bounds = array<i64: 1, 8, 32>}, {transform_indices = @transform_2, window_bounds = array<i64: 1, 8, 32>}, {pipeline_mode = #tpu.pipeline_mode<synchronous>, transform_indices = @transform_3, window_bounds = array<i64: 32, 96>}, {pipeline_mode = #tpu.pipeline_mode<synchronous>, transform_indices = @transform_4, window_bounds = array<i64: 1, 96>}, {pipeline_mode = #tpu.pipeline_mode<synchronous>, transform_indices = @transform_5, window_bounds = array<i64: 32, 32>}, {pipeline_mode = #tpu.pipeline_mode<synchronous>, transform_indices = @transform_6, window_bounds = array<i64: 1, 32>}, {transform_indices = @transform_7, window_bounds = array<i64: 1, 8, 32>}]} {
    %c0 = arith.constant 0 : index
    %c0_0 = arith.constant 0 : index
    %0 = vector.load %arg5[%c0, %c0_0] : memref<32x96xf32, #tpu.memory_space<vmem>>, vector<32x96xf32>
    %c0_1 = arith.constant 0 : index
    %c0_2 = arith.constant 0 : index
    %1 = vector.load %arg6[%c0_1, %c0_2] : memref<1x96xf32, #tpu.memory_space<vmem>>, vector<1x96xf32>
    %c0_i32 = arith.constant 0 : i32
    %2 = arith.cmpi eq, %arg1, %c0_i32 : i32
    %3 = arith.extui %2 : i1 to i32
    %c0_i32_3 = arith.constant 0 : i32
    %4 = arith.cmpi ne, %3, %c0_i32_3 : i32
    scf.if %4 {
      %c0_43 = arith.constant 0 : index
      %c0_44 = arith.constant 0 : index
      %c0_45 = arith.constant 0 : index
      %89 = vector.load %arg3[%c0_43, %c0_44, %c0_45] : memref<1x8x32xf32, #tpu.memory_space<vmem>>, vector<1x8x32xf32>
      %90 = vector.shape_cast %89 : vector<1x8x32xf32> to vector<8x32xf32>
      %c0_46 = arith.constant 0 : index
      %c0_47 = arith.constant 0 : index
      %c0_48 = arith.constant 0 : index
      %91 = vector.load %arg4[%c0_46, %c0_47, %c0_48] : memref<1x8x32xf32, #tpu.memory_space<vmem>>, vector<1x8x32xf32>
      %92 = vector.shape_cast %91 : vector<1x8x32xf32> to vector<8x32xf32>
      %93 = vector.extract_strided_slice %0 {offsets = [0, 32], sizes = [32, 32], strides = [1, 1]} : vector<32x96xf32> to vector<32x32xf32>
      %cst_49 = arith.constant dense<0.000000e+00> : vector<8x32xf32>
      %94 = tpu.matmul %90, %93, %cst_49 {dimension_numbers = #tpu.dot_dimension_numbers<[1], [0], [0], [1], [0, 0, 1, 1], [], []>} : vector<8x32xf32>, vector<32x32xf32>, vector<8x32xf32> -> vector<8x32xf32>
      %95 = vector.extract_strided_slice %0 {offsets = [0, 64], sizes = [32, 32], strides = [1, 1]} : vector<32x96xf32> to vector<32x32xf32>
      %cst_50 = arith.constant dense<0.000000e+00> : vector<8x32xf32>
      %96 = tpu.matmul %92, %95, %cst_50 {dimension_numbers = #tpu.dot_dimension_numbers<[1], [0], [0], [1], [0, 0, 1, 1], [], []>} : vector<8x32xf32>, vector<32x32xf32>, vector<8x32xf32> -> vector<8x32xf32>
      %97 = vector.extract_strided_slice %1 {offsets = [0, 32], sizes = [1, 32], strides = [1, 1]} : vector<1x96xf32> to vector<1x32xf32>
      %98 = vector.broadcast %97 : vector<1x32xf32> to vector<8x32xf32>
      %99 = arith.addf %94, %98 : vector<8x32xf32>
      %100 = vector.extract_strided_slice %1 {offsets = [0, 64], sizes = [1, 32], strides = [1, 1]} : vector<1x96xf32> to vector<1x32xf32>
      %101 = vector.broadcast %100 : vector<1x32xf32> to vector<8x32xf32>
      %102 = arith.addf %96, %101 : vector<8x32xf32>
      %c0_51 = arith.constant 0 : index
      %c0_52 = arith.constant 0 : index
      %103 = vector.load %arg10[%c0_51, %c0_52] : memref<8x32xf32, #tpu.memory_space<vmem>>, vector<8x32xf32>
      tpu.vector_store %arg10[%c0_51, %c0_52], %99 {strides = array<i32>} : memref<8x32xf32, #tpu.memory_space<vmem>>, vector<8x32xf32>,
      %c0_53 = arith.constant 0 : index
      %c0_54 = arith.constant 0 : index
      %104 = vector.load %arg11[%c0_53, %c0_54] : memref<8x32xf32, #tpu.memory_space<vmem>>, vector<8x32xf32>
      tpu.vector_store %arg11[%c0_53, %c0_54], %102 {strides = array<i32>} : memref<8x32xf32, #tpu.memory_space<vmem>>, vector<8x32xf32>,
    } else {
    }
    %c0_4 = arith.constant 0 : index
    %c0_5 = arith.constant 0 : index
    %c0_6 = arith.constant 0 : index
    %5 = vector.load %arg2[%c0_4, %c0_5, %c0_6] : memref<1x8x32xf32, #tpu.memory_space<vmem>>, vector<1x8x32xf32>
    %6 = vector.shape_cast %5 : vector<1x8x32xf32> to vector<8x32xf32>
    %7 = vector.extract_strided_slice %0 {offsets = [0, 0], sizes = [32, 32], strides = [1, 1]} : vector<32x96xf32> to vector<32x32xf32>
    %cst = arith.constant dense<0.000000e+00> : vector<8x32xf32>
    %8 = tpu.matmul %6, %7, %cst {dimension_numbers = #tpu.dot_dimension_numbers<[1], [0], [0], [1], [0, 0, 1, 1], [], []>} : vector<8x32xf32>, vector<32x32xf32>, vector<8x32xf32> -> vector<8x32xf32>
    %9 = vector.extract_strided_slice %1 {offsets = [0, 0], sizes = [1, 32], strides = [1, 1]} : vector<1x96xf32> to vector<1x32xf32>
    %10 = vector.broadcast %9 : vector<1x32xf32> to vector<8x32xf32>
    %11 = arith.addf %8, %10 : vector<8x32xf32>
    %cst_7 = arith.constant 0.353553385 : f32
    %12 = vector.broadcast %cst_7 : f32 to vector<8x32xf32>
    %13 = arith.mulf %11, %12 : vector<8x32xf32>
    %c0_8 = arith.constant 0 : index
    %c0_9 = arith.constant 0 : index
    %14 = vector.load %arg10[%c0_8, %c0_9] : memref<8x32xf32, #tpu.memory_space<vmem>>, vector<8x32xf32>
    %c0_10 = arith.constant 0 : index
    %c0_11 = arith.constant 0 : index
    %15 = vector.load %arg11[%c0_10, %c0_11] : memref<8x32xf32, #tpu.memory_space<vmem>>, vector<8x32xf32>
    %16 = vector.extract_strided_slice %13 {offsets = [0, 0], sizes = [8, 8], strides = [1, 1]} : vector<8x32xf32> to vector<8x8xf32>
    %17 = vector.extract_strided_slice %14 {offsets = [0, 0], sizes = [8, 8], strides = [1, 1]} : vector<8x32xf32> to vector<8x8xf32>
    %cst_12 = arith.constant dense<0.000000e+00> : vector<8x8xf32>
    %18 = tpu.matmul %16, %17, %cst_12 {dimension_numbers = #tpu.dot_dimension_numbers<[1], [1], [0], [0], [0, 0, 1, 0], [], []>} : vector<8x8xf32>, vector<8x8xf32>, vector<8x8xf32> -> vector<8x8xf32>
    %cst_13 = arith.constant dense<0xFF800000> : vector<8xf32>
    %19 = vector.multi_reduction <maximumf>, %18, %cst_13 [1] : vector<8x8xf32> to vector<8xf32>
    %20 = vector.shape_cast %19 : vector<8xf32> to vector<8x1xf32>
    %21 = vector.broadcast %20 : vector<8x1xf32> to vector<8x8xf32>
    %22 = arith.subf %18, %21 : vector<8x8xf32>
    %23 = math.exp %22 : vector<8x8xf32>
    %cst_14 = arith.constant dense<0.000000e+00> : vector<8xf32>
    %24 = vector.multi_reduction <add>, %23, %cst_14 [1] : vector<8x8xf32> to vector<8xf32>
    %25 = vector.shape_cast %24 : vector<8xf32> to vector<8x1xf32>
    %26 = tpu.reciprocal %25 {approx = true} : vector<8x1xf32> -> vector<8x1xf32>
    %27 = vector.broadcast %26 : vector<8x1xf32> to vector<8x8xf32>
    %28 = arith.mulf %23, %27 : vector<8x8xf32>
    %29 = vector.extract_strided_slice %15 {offsets = [0, 0], sizes = [8, 8], strides = [1, 1]} : vector<8x32xf32> to vector<8x8xf32>
    %cst_15 = arith.constant dense<0.000000e+00> : vector<8x8xf32>
    %30 = tpu.matmul %28, %29, %cst_15 {dimension_numbers = #tpu.dot_dimension_numbers<[1], [0], [0], [1], [0, 0, 1, 1], [], []>} : vector<8x8xf32>, vector<8x8xf32>, vector<8x8xf32> -> vector<8x8xf32>
    %c0_16 = arith.constant 0 : index
    %c0_17 = arith.constant 0 : index
    %31 = vector.load %arg12[%c0_16, %c0_17] : memref<8x32xf32, #tpu.memory_space<vmem>>, vector<8x8xf32>
    tpu.vector_store %arg12[%c0_16, %c0_17], %30 {strides = array<i32>} : memref<8x32xf32, #tpu.memory_space<vmem>>, vector<8x8xf32>,
    %32 = vector.extract_strided_slice %13 {offsets = [0, 8], sizes = [8, 8], strides = [1, 1]} : vector<8x32xf32> to vector<8x8xf32>
    %33 = vector.extract_strided_slice %14 {offsets = [0, 8], sizes = [8, 8], strides = [1, 1]} : vector<8x32xf32> to vector<8x8xf32>
    %cst_18 = arith.constant dense<0.000000e+00> : vector<8x8xf32>
    %34 = tpu.matmul %32, %33, %cst_18 {dimension_numbers = #tpu.dot_dimension_numbers<[1], [1], [0], [0], [0, 0, 1, 0], [], []>} : vector<8x8xf32>, vector<8x8xf32>, vector<8x8xf32> -> vector<8x8xf32>
    %cst_19 = arith.constant dense<0xFF800000> : vector<8xf32>
    %35 = vector.multi_reduction <maximumf>, %34, %cst_19 [1] : vector<8x8xf32> to vector<8xf32>
    %36 = vector.shape_cast %35 : vector<8xf32> to vector<8x1xf32>
    %37 = vector.broadcast %36 : vector<8x1xf32> to vector<8x8xf32>
    %38 = arith.subf %34, %37 : vector<8x8xf32>
    %39 = math.exp %38 : vector<8x8xf32>
    %cst_20 = arith.constant dense<0.000000e+00> : vector<8xf32>
    %40 = vector.multi_reduction <add>, %39, %cst_20 [1] : vector<8x8xf32> to vector<8xf32>
    %41 = vector.shape_cast %40 : vector<8xf32> to vector<8x1xf32>
    %42 = tpu.reciprocal %41 {approx = true} : vector<8x1xf32> -> vector<8x1xf32>
    %43 = vector.broadcast %42 : vector<8x1xf32> to vector<8x8xf32>
    %44 = arith.mulf %39, %43 : vector<8x8xf32>
    %45 = vector.extract_strided_slice %15 {offsets = [0, 8], sizes = [8, 8], strides = [1, 1]} : vector<8x32xf32> to vector<8x8xf32>
    %cst_21 = arith.constant dense<0.000000e+00> : vector<8x8xf32>
    %46 = tpu.matmul %44, %45, %cst_21 {dimension_numbers = #tpu.dot_dimension_numbers<[1], [0], [0], [1], [0, 0, 1, 1], [], []>} : vector<8x8xf32>, vector<8x8xf32>, vector<8x8xf32> -> vector<8x8xf32>
    %c0_22 = arith.constant 0 : index
    %c8 = arith.constant 8 : index
    %47 = vector.load %arg12[%c0_22, %c8] : memref<8x32xf32, #tpu.memory_space<vmem>>, vector<8x8xf32>
    tpu.vector_store %arg12[%c0_22, %c8], %46 {strides = array<i32>} : memref<8x32xf32, #tpu.memory_space<vmem>>, vector<8x8xf32>,
    %48 = vector.extract_strided_slice %13 {offsets = [0, 16], sizes = [8, 8], strides = [1, 1]} : vector<8x32xf32> to vector<8x8xf32>
    %49 = vector.extract_strided_slice %14 {offsets = [0, 16], sizes = [8, 8], strides = [1, 1]} : vector<8x32xf32> to vector<8x8xf32>
    %cst_23 = arith.constant dense<0.000000e+00> : vector<8x8xf32>
    %50 = tpu.matmul %48, %49, %cst_23 {dimension_numbers = #tpu.dot_dimension_numbers<[1], [1], [0], [0], [0, 0, 1, 0], [], []>} : vector<8x8xf32>, vector<8x8xf32>, vector<8x8xf32> -> vector<8x8xf32>
    %cst_24 = arith.constant dense<0xFF800000> : vector<8xf32>
    %51 = vector.multi_reduction <maximumf>, %50, %cst_24 [1] : vector<8x8xf32> to vector<8xf32>
    %52 = vector.shape_cast %51 : vector<8xf32> to vector<8x1xf32>
    %53 = vector.broadcast %52 : vector<8x1xf32> to vector<8x8xf32>
    %54 = arith.subf %50, %53 : vector<8x8xf32>
    %55 = math.exp %54 : vector<8x8xf32>
    %cst_25 = arith.constant dense<0.000000e+00> : vector<8xf32>
    %56 = vector.multi_reduction <add>, %55, %cst_25 [1] : vector<8x8xf32> to vector<8xf32>
    %57 = vector.shape_cast %56 : vector<8xf32> to vector<8x1xf32>
    %58 = tpu.reciprocal %57 {approx = true} : vector<8x1xf32> -> vector<8x1xf32>
    %59 = vector.broadcast %58 : vector<8x1xf32> to vector<8x8xf32>
    %60 = arith.mulf %55, %59 : vector<8x8xf32>
    %61 = vector.extract_strided_slice %15 {offsets = [0, 16], sizes = [8, 8], strides = [1, 1]} : vector<8x32xf32> to vector<8x8xf32>
    %cst_26 = arith.constant dense<0.000000e+00> : vector<8x8xf32>
    %62 = tpu.matmul %60, %61, %cst_26 {dimension_numbers = #tpu.dot_dimension_numbers<[1], [0], [0], [1], [0, 0, 1, 1], [], []>} : vector<8x8xf32>, vector<8x8xf32>, vector<8x8xf32> -> vector<8x8xf32>
    %c0_27 = arith.constant 0 : index
    %c16 = arith.constant 16 : index
    %63 = vector.load %arg12[%c0_27, %c16] : memref<8x32xf32, #tpu.memory_space<vmem>>, vector<8x8xf32>
    tpu.vector_store %arg12[%c0_27, %c16], %62 {strides = array<i32>} : memref<8x32xf32, #tpu.memory_space<vmem>>, vector<8x8xf32>,
    %64 = vector.extract_strided_slice %13 {offsets = [0, 24], sizes = [8, 8], strides = [1, 1]} : vector<8x32xf32> to vector<8x8xf32>
    %65 = vector.extract_strided_slice %14 {offsets = [0, 24], sizes = [8, 8], strides = [1, 1]} : vector<8x32xf32> to vector<8x8xf32>
    %cst_28 = arith.constant dense<0.000000e+00> : vector<8x8xf32>
    %66 = tpu.matmul %64, %65, %cst_28 {dimension_numbers = #tpu.dot_dimension_numbers<[1], [1], [0], [0], [0, 0, 1, 0], [], []>} : vector<8x8xf32>, vector<8x8xf32>, vector<8x8xf32> -> vector<8x8xf32>
    %cst_29 = arith.constant dense<0xFF800000> : vector<8xf32>
    %67 = vector.multi_reduction <maximumf>, %66, %cst_29 [1] : vector<8x8xf32> to vector<8xf32>
    %68 = vector.shape_cast %67 : vector<8xf32> to vector<8x1xf32>
    %69 = vector.broadcast %68 : vector<8x1xf32> to vector<8x8xf32>
    %70 = arith.subf %66, %69 : vector<8x8xf32>
    %71 = math.exp %70 : vector<8x8xf32>
    %cst_30 = arith.constant dense<0.000000e+00> : vector<8xf32>
    %72 = vector.multi_reduction <add>, %71, %cst_30 [1] : vector<8x8xf32> to vector<8xf32>
    %73 = vector.shape_cast %72 : vector<8xf32> to vector<8x1xf32>
    %74 = tpu.reciprocal %73 {approx = true} : vector<8x1xf32> -> vector<8x1xf32>
    %75 = vector.broadcast %74 : vector<8x1xf32> to vector<8x8xf32>
    %76 = arith.mulf %71, %75 : vector<8x8xf32>
    %77 = vector.extract_strided_slice %15 {offsets = [0, 24], sizes = [8, 8], strides = [1, 1]} : vector<8x32xf32> to vector<8x8xf32>
    %cst_31 = arith.constant dense<0.000000e+00> : vector<8x8xf32>
    %78 = tpu.matmul %76, %77, %cst_31 {dimension_numbers = #tpu.dot_dimension_numbers<[1], [0], [0], [1], [0, 0, 1, 1], [], []>} : vector<8x8xf32>, vector<8x8xf32>, vector<8x8xf32> -> vector<8x8xf32>
    %c0_32 = arith.constant 0 : index
    %c24 = arith.constant 24 : index
    %79 = vector.load %arg12[%c0_32, %c24] : memref<8x32xf32, #tpu.memory_space<vmem>>, vector<8x8xf32>
    tpu.vector_store %arg12[%c0_32, %c24], %78 {strides = array<i32>} : memref<8x32xf32, #tpu.memory_space<vmem>>, vector<8x8xf32>,
    %c0_33 = arith.constant 0 : index
    %c0_34 = arith.constant 0 : index
    %80 = vector.load %arg12[%c0_33, %c0_34] : memref<8x32xf32, #tpu.memory_space<vmem>>, vector<8x32xf32>
    %c0_35 = arith.constant 0 : index
    %c0_36 = arith.constant 0 : index
    %81 = vector.load %arg7[%c0_35, %c0_36] : memref<32x32xf32, #tpu.memory_space<vmem>>, vector<32x32xf32>
    %cst_37 = arith.constant dense<0.000000e+00> : vector<8x32xf32>
    %82 = tpu.matmul %80, %81, %cst_37 {dimension_numbers = #tpu.dot_dimension_numbers<[1], [0], [0], [1], [0, 0, 1, 1], [], []>} : vector<8x32xf32>, vector<32x32xf32>, vector<8x32xf32> -> vector<8x32xf32>
    %c0_38 = arith.constant 0 : index
    %c0_39 = arith.constant 0 : index
    %83 = vector.load %arg8[%c0_38, %c0_39] : memref<1x32xf32, #tpu.memory_space<vmem>>, vector<1x32xf32>
    %84 = vector.broadcast %83 : vector<1x32xf32> to vector<8x32xf32>
    %85 = arith.addf %82, %84 : vector<8x32xf32>
    %c0_40 = arith.constant 0 : index
    %c0_41 = arith.constant 0 : index
    %c0_42 = arith.constant 0 : index
    %86 = vector.load %arg9[%c0_40, %c0_41, %c0_42] : memref<1x8x32xf32, #tpu.memory_space<vmem>>, vector<1x8x32xf32>
    %87 = vector.shape_cast %86 : vector<1x8x32xf32> to vector<8x32xf32>
    %88 = vector.shape_cast %85 : vector<8x32xf32> to vector<1x8x32xf32>
    tpu.vector_store %arg9[%c0_40, %c0_41, %c0_42], %88 {strides = array<i32>} : memref<1x8x32xf32, #tpu.memory_space<vmem>>, vector<1x8x32xf32>,
    return
  }
  func.func @transform_0(%arg0: i32, %arg1: i32) -> (i32, i32, i32) {
    %c0_i32 = arith.constant 0 : i32
    %c0_i32_0 = arith.constant 0 : i32
    return %arg0, %arg1, %c0_i32 : i32, i32, i32
  }
  func.func @transform_1(%arg0: i32, %arg1: i32) -> (i32, i32, i32) {
    %c0_i32 = arith.constant 0 : i32
    %c0_i32_0 = arith.constant 0 : i32
    %c0_i32_1 = arith.constant 0 : i32
    return %arg0, %c0_i32, %c0_i32_0 : i32, i32, i32
  }
  func.func @transform_2(%arg0: i32, %arg1: i32) -> (i32, i32, i32) {
    %c0_i32 = arith.constant 0 : i32
    %c0_i32_0 = arith.constant 0 : i32
    %c0_i32_1 = arith.constant 0 : i32
    return %arg0, %c0_i32, %c0_i32_0 : i32, i32, i32
  }
  func.func @transform_3(%arg0: i32, %arg1: i32) -> (i32, i32) {
    %c0_i32 = arith.constant 0 : i32
    %c0_i32_0 = arith.constant 0 : i32
    %c0_i32_1 = arith.constant 0 : i32
    return %c0_i32, %c0_i32_0 : i32, i32
  }
  func.func @transform_4(%arg0: i32, %arg1: i32) -> (i32, i32) {
    %c0_i32 = arith.constant 0 : i32
    %c0_i32_0 = arith.constant 0 : i32
    %c0_i32_1 = arith.constant 0 : i32
    return %c0_i32, %c0_i32_0 : i32, i32
  }
  func.func @transform_5(%arg0: i32, %arg1: i32) -> (i32, i32) {
    %c0_i32 = arith.constant 0 : i32
    %c0_i32_0 = arith.constant 0 : i32
    %c0_i32_1 = arith.constant 0 : i32
    return %c0_i32, %c0_i32_0 : i32, i32
  }
  func.func @transform_6(%arg0: i32, %arg1: i32) -> (i32, i32) {
    %c0_i32 = arith.constant 0 : i32
    %c0_i32_0 = arith.constant 0 : i32
    %c0_i32_1 = arith.constant 0 : i32
    return %c0_i32, %c0_i32_0 : i32, i32
  }
  func.func @transform_7(%arg0: i32, %arg1: i32) -> (i32, i32, i32) {
    %c0_i32 = arith.constant 0 : i32
    %c0_i32_0 = arith.constant 0 : i32
    return %arg0, %arg1, %c0_i32 : i32, i32, i32
  }
}

</mosaic_0001>

<llo_original>
// kernel: tpu_custom_call.1
$region0: #{tpu_custom_call.1}
  #allocation0 [shape = 'u32[]', space=smem, size = 0x4, offset = 0x4, fixed_abs, tag = 'smem constant byte address 0x4 - core index']
  #allocation1 [shape = 'u32[144,128]{1,0:T(1,128)}', space=vmem, size = 0x12000, scoped, tag = 'internal scratch']
  #allocation2 [shape = 'f32[8,32]{1,0:T(8,128)}', space=vmem, size = 0x1000, scoped, tag = 'scratch operand']
  #allocation3 [shape = 'f32[8,32]{1,0:T(8,128)}', space=vmem, size = 0x1000, scoped, tag = 'scratch operand']
  #allocation4 [shape = 'f32[8,32]{1,0:T(8,128)}', space=vmem, size = 0x1000, scoped, tag = 'scratch operand']
  %s0 = inlined_call_operand.hbm [shape: f32[2,8,32], index: 0, kind: input, shape index: {}]
  %s1 = inlined_call_operand.hbm [shape: f32[2,8,32], index: 1, kind: input, shape index: {}]
  %s2 = inlined_call_operand.hbm [shape: f32[2,8,32], index: 2, kind: input, shape index: {}]
  %s3 = inlined_call_operand.hbm [shape: f32[32,96], index: 3, kind: input, shape index: {}]
  %s4 = inlined_call_operand.vmem [shape: f32[1,96], index: 4, kind: input, shape index: {}]
  %s5 = inlined_call_operand.hbm [shape: f32[32,32], index: 5, kind: input, shape index: {}]
  %s6 = inlined_call_operand.vmem [shape: f32[1,32], index: 6, kind: input, shape index: {}]
  %s7 = inlined_call_operand.hbm [shape: f32[2,8,32], index: 7, kind: output, shape index: {}]
  %s8 = sld [smem:[#allocation0]]
  $region85: #{tpu_custom_call.1} parent=0
    _
  %s10 = ssub.s32 1, %s8
  %s11 = scalar_select 0, %s10, %s8
  $region1: #{tpu_custom_call.1} parent=0
    #allocation5 [shape = 'u8[8192]{0}', space=vmem, size = 0x2000, scoped, tag = 'input window, operand 0']
    #allocation6 [shape = 's32[2]{0}', space=sflag, size = 0x8, scoped, tag = 'scoped memory for tpu_custom_call.1']
    #allocation7 [shape = 's32[2]{0}', space=sflag, size = 0x8, scoped, tag = 'scoped memory for tpu_custom_call.1']
    #allocation8 [shape = 'u8[8192]{0}', space=vmem, size = 0x2000, scoped, tag = 'input window, operand 1']
    #allocation9 [shape = 's32[2]{0}', space=sflag, size = 0x8, scoped, tag = 'scoped memory for tpu_custom_call.1']
    #allocation10 [shape = 'u8[8192]{0}', space=vmem, size = 0x2000, scoped, tag = 'input window, operand 2']
    #allocation11 [shape = 'u8[16384]{0}', space=vmem, size = 0x4000, scoped, tag = 'input window, operand 3, single buffered']
    #allocation12 [shape = 's32[1]{0}', space=sflag, size = 0x4, scoped, tag = 'scoped memory for tpu_custom_call.1']
    #allocation13 [shape = 'u8[16384]{0}', space=vmem, size = 0x4000, scoped, tag = 'input window, operand 5, single buffered']
    #allocation14 [shape = 'u8[8192]{0}', space=vmem, size = 0x2000, scoped, tag = 'output window, operand 0']
    %12 = vsyncpa [#allocation6], 0
    %s13 = scalar_lea.sflag [#allocation6], 1
    %14 = vsyncpa %s13, 0
    %15 = vsyncpa [#allocation9], 0
    %s16 = scalar_lea.sflag [#allocation9], 1
    %17 = vsyncpa %s16, 0
    %18 = vsyncpa [#allocation12], 0
    %19 = vsyncpa [#allocation7], 0
    %s20 = scalar_lea.sflag [#allocation7], 1
    %21 = vsyncpa %s20, 0
    loop: start=0, step=1, limit=4
    $region2: #{tpu_custom_call.1} parent=1 // loop_pre_header
      _
    $region3: #{tpu_custom_call.1} parent=1 // loop_header
      %s23 = sphi 0, %s27
      %p24 = scmp.ge.s32.totalorder %s23, 4
      %s30 = sphi 0, %s42
      %s31 = sphi 0, %s38
      %s32 = sphi 0, %s30
      %s33 = sphi 0, %s31
      %s34 = sphi 0, %s32
      %s35 = sphi 0, %s33
      %s47 = sphi 0, %s49
      %s50 = sphi 0, %s47
      %s51 = sphi 0, %s50
      %s67 = sphi 0, %s51
      %s73 = sphi 0, %s75
      %s76 = sphi 0, %s73
      %s77 = sphi 0, %s76
      %s93 = sphi 0, %s77
      %s99 = sphi 0, %s101
      %s102 = sphi 0, %s99
      %s103 = sphi 0, %s102
      %s119 = sphi 0, %s103
      %s123 = sphi 0, %s123
      %s125 = sphi 0, %s123
      %s126 = sphi 0, %s125
      %s140 = sphi 0, %s126
      %s144 = sphi 0, %s144
      %s146 = sphi 0, %s144
      %s147 = sphi 0, %s146
      %s161 = sphi 0, %s147
      %s165 = sphi 0, %s165
      %s167 = sphi 0, %s165
      %s168 = sphi 0, %s167
      %s182 = sphi 0, %s168
      %s186 = sphi 0, %s186
      %s188 = sphi 0, %s186
      %s189 = sphi 0, %s188
      %s203 = sphi 0, %s189
      %s211 = sphi 0, %s213
      %s214 = sphi 0, %s211
      %s215 = sphi 0, %s214
      %s231 = sphi 0, %s215
    $region4: #{tpu_custom_call.1} parent=1 // loop_header_branch
      %26 = sbr.rel (%p24) target = $region8
    $region5: #{tpu_custom_call.1} parent=1 // loop_body
      %s28 = ssub.s32 %s23, 1
      %s29 = ssub.s32 %s23, 2
      %s36 = sadd.s32 1, %s31
      %p37 = scmp.ge.s32.totalorder %s36, 1
      %s38 = scalar_select %p37, 0, %s36
      %s39 = sadd.s32 1, %s30
      %s40 = scalar_select %p37, %s39, %s30
      %p41 = scmp.ge.s32.totalorder %s40, 2
      %s42 = scalar_select %p41, 0, %s40
      %s43 = ssub.s32 %s30, %s42
      %s44 = ssub.s32 %s31, %s38
      %s45 = sor.u32 %s43, %s44
      %p46 = scmp.eq.s32.totalorder %s45, 0
      %s48 = sadd.s32 %s47, 1
      %s49 = scalar_select %p46, %s47, %s48
      %p52 = pneg %p46
      %p53 = scmp.eq.s32.totalorder %s23, 1
      %p54 = por %p52, %p53
      %p55 = scmp.ne.s32.totalorder %s47, %s50
      %p56 = scmp.eq.s32.totalorder %s23, 0
      %p57 = por %p55, %p56
      %p58 = scmp.ne.s32.totalorder %s47, %s50
      %p59 = scmp.eq.s32.totalorder %s28, 1
      %p60 = por %p58, %p59
      %p61 = scmp.ne.s32.totalorder %s50, %s51
      %p62 = scmp.eq.s32.totalorder %s28, 0
      %p63 = por %p61, %p62
      %p64 = scmp.ne.s32.totalorder %s50, %s51
      %p65 = scmp.eq.s32.totalorder %s29, 1
      %p66 = por %p64, %p65
      %p68 = scmp.ne.s32.totalorder %s51, %s67
      %p69 = scmp.eq.s32.totalorder %s29, 0
      %p70 = por %p68, %p69
      %s71 = ssub.s32 %s30, %s42
      %p72 = scmp.eq.s32.totalorder %s71, 0
      %s74 = sadd.s32 %s73, 1
      %s75 = scalar_select %p72, %s73, %s74
      %p78 = pneg %p72
      %p79 = scmp.eq.s32.totalorder %s23, 1
      %p80 = por %p78, %p79
      %p81 = scmp.ne.s32.totalorder %s73, %s76
      %p82 = scmp.eq.s32.totalorder %s23, 0
      %p83 = por %p81, %p82
      %p84 = scmp.ne.s32.totalorder %s73, %s76
      %p85 = scmp.eq.s32.totalorder %s28, 1
      %p86 = por %p84, %p85
      %p87 = scmp.ne.s32.totalorder %s76, %s77
      %p88 = scmp.eq.s32.totalorder %s28, 0
      %p89 = por %p87, %p88
      %p90 = scmp.ne.s32.totalorder %s76, %s77
      %p91 = scmp.eq.s32.totalorder %s29, 1
      %p92 = por %p90, %p91
      %p94 = scmp.ne.s32.totalorder %s77, %s93
      %p95 = scmp.eq.s32.totalorder %s29, 0
      %p96 = por %p94, %p95
      %s97 = ssub.s32 %s30, %s42
      %p98 = scmp.eq.s32.totalorder %s97, 0
      %s100 = sadd.s32 %s99, 1
      %s101 = scalar_select %p98, %s99, %s100
      %p104 = pneg %p98
      %p105 = scmp.eq.s32.totalorder %s23, 1
      %p106 = por %p104, %p105
      %p107 = scmp.ne.s32.totalorder %s99, %s102
      %p108 = scmp.eq.s32.totalorder %s23, 0
      %p109 = por %p107, %p108
      %p110 = scmp.ne.s32.totalorder %s99, %s102
      %p111 = scmp.eq.s32.totalorder %s28, 1
      %p112 = por %p110, %p111
      %p113 = scmp.ne.s32.totalorder %s102, %s103
      %p114 = scmp.eq.s32.totalorder %s28, 0
      %p115 = por %p113, %p114
      %p116 = scmp.ne.s32.totalorder %s102, %s103
      %p117 = scmp.eq.s32.totalorder %s29, 1
      %p118 = por %p116, %p117
      %p120 = scmp.ne.s32.totalorder %s103, %s119
      %p121 = scmp.eq.s32.totalorder %s29, 0
      %p122 = por %p120, %p121
      %s124 = sadd.s32 %s123, 1
      %p127 = scmp.eq.s32.totalorder %s23, 1
      %p128 = scmp.ne.s32.totalorder %s123, %s125
      %p129 = scmp.eq.s32.totalorder %s23, 0
      %p130 = por %p128, %p129
      %p131 = scmp.ne.s32.totalorder %s123, %s125
      %p132 = scmp.eq.s32.totalorder %s28, 1
      %p133 = por %p131, %p132
      %p134 = scmp.ne.s32.totalorder %s125, %s126
      %p135 = scmp.eq.s32.totalorder %s28, 0
      %p136 = por %p134, %p135
      %p137 = scmp.ne.s32.totalorder %s125, %s126
      %p138 = scmp.eq.s32.totalorder %s29, 1
      %p139 = por %p137, %p138
      %p141 = scmp.ne.s32.totalorder %s126, %s140
      %p142 = scmp.eq.s32.totalorder %s29, 0
      %p143 = por %p141, %p142
      %s145 = sadd.s32 %s144, 1
      %p148 = scmp.eq.s32.totalorder %s23, 1
      %p149 = scmp.ne.s32.totalorder %s144, %s146
      %p150 = scmp.eq.s32.totalorder %s23, 0
      %p151 = por %p149, %p150
      %p152 = scmp.ne.s32.totalorder %s144, %s146
      %p153 = scmp.eq.s32.totalorder %s28, 1
      %p154 = por %p152, %p153
      %p155 = scmp.ne.s32.totalorder %s146, %s147
      %p156 = scmp.eq.s32.totalorder %s28, 0
      %p157 = por %p155, %p156
      %p158 = scmp.ne.s32.totalorder %s146, %s147
      %p159 = scmp.eq.s32.totalorder %s29, 1
      %p160 = por %p158, %p159
      %p162 = scmp.ne.s32.totalorder %s147, %s161
      %p163 = scmp.eq.s32.totalorder %s29, 0
      %p164 = por %p162, %p163
      %s166 = sadd.s32 %s165, 1
      %p169 = scmp.eq.s32.totalorder %s23, 1
      %p170 = scmp.ne.s32.totalorder %s165, %s167
      %p171 = scmp.eq.s32.totalorder %s23, 0
      %p172 = por %p170, %p171
      %p173 = scmp.ne.s32.totalorder %s165, %s167
      %p174 = scmp.eq.s32.totalorder %s28, 1
      %p175 = por %p173, %p174
      %p176 = scmp.ne.s32.totalorder %s167, %s168
      %p177 = scmp.eq.s32.totalorder %s28, 0
      %p178 = por %p176, %p177
      %p179 = scmp.ne.s32.totalorder %s167, %s168
      %p180 = scmp.eq.s32.totalorder %s29, 1
      %p181 = por %p179, %p180
      %p183 = scmp.ne.s32.totalorder %s168, %s182
      %p184 = scmp.eq.s32.totalorder %s29, 0
      %p185 = por %p183, %p184
      %s187 = sadd.s32 %s186, 1
      %p190 = scmp.eq.s32.totalorder %s23, 1
      %p191 = scmp.ne.s32.totalorder %s186, %s188
      %p192 = scmp.eq.s32.totalorder %s23, 0
      %p193 = por %p191, %p192
      %p194 = scmp.ne.s32.totalorder %s186, %s188
      %p195 = scmp.eq.s32.totalorder %s28, 1
      %p196 = por %p194, %p195
      %p197 = scmp.ne.s32.totalorder %s188, %s189
      %p198 = scmp.eq.s32.totalorder %s28, 0
      %p199 = por %p197, %p198
      %p200 = scmp.ne.s32.totalorder %s188, %s189
      %p201 = scmp.eq.s32.totalorder %s29, 1
      %p202 = por %p200, %p201
      %p204 = scmp.ne.s32.totalorder %s189, %s203
      %p205 = scmp.eq.s32.totalorder %s29, 0
      %p206 = por %p204, %p205
      %s207 = ssub.s32 %s30, %s42
      %s208 = ssub.s32 %s31, %s38
      %s209 = sor.u32 %s207, %s208
      %p210 = scmp.eq.s32.totalorder %s209, 0
      %s212 = sadd.s32 %s211, 1
      %s213 = scalar_select %p210, %s211, %s212
      %p216 = pneg %p210
      %p217 = scmp.eq.s32.totalorder %s23, 1
      %p218 = por %p216, %p217
      %p219 = scmp.ne.s32.totalorder %s211, %s214
      %p220 = scmp.eq.s32.totalorder %s23, 0
      %p221 = por %p219, %p220
      %p222 = scmp.ne.s32.totalorder %s211, %s214
      %p223 = scmp.eq.s32.totalorder %s28, 1
      %p224 = por %p222, %p223
      %p225 = scmp.ne.s32.totalorder %s214, %s215
      %p226 = scmp.eq.s32.totalorder %s28, 0
      %p227 = por %p225, %p226
      %p228 = scmp.ne.s32.totalorder %s214, %s215
      %p229 = scmp.eq.s32.totalorder %s29, 1
      %p230 = por %p228, %p229
      %p232 = scmp.ne.s32.totalorder %s215, %s231
      %p233 = scmp.eq.s32.totalorder %s29, 0
      %p234 = por %p232, %p233
      %p235 = scmp.le.s32.totalorder 1, %s23
      %p236 = scmp.lt.s32.totalorder %s23, 3
      %p237 = pnand %p235, %p236
      %p238 = pneg %p237
      // Predicated region
      $region9: #{tpu_custom_call.1} parent=5 // pred_check
        _
      $region10: #{tpu_custom_call.1} parent=5 // pred_check_branch
        %240 = sbr.rel (%p237) target = $region12
      $region11: #{tpu_custom_call.1} parent=5 // pred_region
        %s241 = ssub.s32 %s23, 1
        // Predicated region
        $region13: #{tpu_custom_call.1} parent=11 // pred_check
          %p242 = pneg %p136
        $region14: #{tpu_custom_call.1} parent=11 // pred_check_branch
          %244 = sbr.rel (%p242) target = $region16
        $region15: #{tpu_custom_call.1} parent=11 // pred_region
          %s246 = ssub.s32 512, 512
          %247 = vsyncadd [#allocation12], %s246
          %s248 = sshll.u32 [#allocation11], 4
          %s249 = int_to_ptr.vmem [resolvable:$true] %s248
          %254 = dma.hbm_to_vmem [thread:$0]  %s3, 512, %s249, [#allocation12], 128, 128, 8
        $region16: #{tpu_custom_call.1} parent=11 // pred_fallthru
          _
        // Predicated region
        $region17: #{tpu_custom_call.1} parent=11 // pred_check
          %p255 = pneg %p157
        $region18: #{tpu_custom_call.1} parent=11 // pred_check_branch
          %257 = sbr.rel (%p255) target = $region20
        $region19: #{tpu_custom_call.1} parent=11 // pred_region
          _
        $region20: #{tpu_custom_call.1} parent=11 // pred_fallthru
          _
        // Predicated region
        $region21: #{tpu_custom_call.1} parent=11 // pred_check
          %p258 = pneg %p178
        $region22: #{tpu_custom_call.1} parent=11 // pred_check_branch
          %260 = sbr.rel (%p258) target = $region24
        $region23: #{tpu_custom_call.1} parent=11 // pred_region
          %s262 = ssub.s32 512, 512
          %263 = vsyncadd [#allocation12], %s262
          %s264 = sshll.u32 [#allocation13], 4
          %s265 = int_to_ptr.vmem [resolvable:$true] %s264
          %270 = dma.hbm_to_vmem [thread:$0]  %s5, 512, %s265, [#allocation12], 128, 128, 8
        $region24: #{tpu_custom_call.1} parent=11 // pred_fallthru
          _
        // Predicated region
        $region25: #{tpu_custom_call.1} parent=11 // pred_check
          %p271 = pneg %p199
        $region26: #{tpu_custom_call.1} parent=11 // pred_check_branch
          %273 = sbr.rel (%p271) target = $region28
        $region27: #{tpu_custom_call.1} parent=11 // pred_region
          _
        $region28: #{tpu_custom_call.1} parent=11 // pred_fallthru
          _
      $region12: #{tpu_custom_call.1} parent=5 // pred_fallthru
        _
      %p274 = scmp.lt.s32.totalorder %s23, 2
      // Predicated region
      $region29: #{tpu_custom_call.1} parent=5 // pred_check
        %p275 = pneg %p274
      $region30: #{tpu_custom_call.1} parent=5 // pred_check_branch
        %277 = sbr.rel (%p275) target = $region32
      $region31: #{tpu_custom_call.1} parent=5 // pred_region
        // Predicated region
        $region33: #{tpu_custom_call.1} parent=31 // pred_check
          %p278 = pneg %p57
        $region34: #{tpu_custom_call.1} parent=31 // pred_check_branch
          %280 = sbr.rel (%p278) target = $region36
        $region35: #{tpu_custom_call.1} parent=31 // pred_region
          %s281 = sand.u32 %s47, 1
          %s282 = scalar_lea.sflag [#allocation6], %s281
          %s283 = sand.u32 %s47, 1
          %s284 = smul.addr %s283, 8
          %s285 = scalar_lea.vmem [#allocation5], %s284
          %s287 = ssub.s32 128, 128
          %288 = vsyncadd %s282, %s287
          %s289 = sadd.s32 %s31, %s30
          %s290 = smul.addr %s289, 128
          %s291 = scalar_lea.hbm %s0, %s290
          %s293 = sshll.u32 %s285, 4
          %s294 = int_to_ptr.vmem [resolvable:$true] %s293
          %296 = dma.hbm_to_vmem [thread:$0]  %s291, 128, %s294, %s282
        $region36: #{tpu_custom_call.1} parent=31 // pred_fallthru
          _
        // Predicated region
        $region37: #{tpu_custom_call.1} parent=31 // pred_check
          %p297 = pneg %p83
        $region38: #{tpu_custom_call.1} parent=31 // pred_check_branch
          %299 = sbr.rel (%p297) target = $region40
        $region39: #{tpu_custom_call.1} parent=31 // pred_region
          %s300 = sand.u32 %s23, 1
          %s301 = scalar_lea.sflag [#allocation9], %s300
          %s302 = sand.u32 %s73, 1
          %s303 = smul.addr %s302, 8
          %s304 = scalar_lea.vmem [#allocation8], %s303
          %s306 = ssub.s32 128, 128
          %307 = vsyncadd %s301, %s306
          %s308 = smul.addr %s30, 128
          %s309 = scalar_lea.hbm %s1, %s308
          %s311 = sshll.u32 %s304, 4
          %s312 = int_to_ptr.vmem [resolvable:$true] %s311
          %314 = dma.hbm_to_vmem [thread:$0]  %s309, 128, %s312, %s301
        $region40: #{tpu_custom_call.1} parent=31 // pred_fallthru
          _
        // Predicated region
        $region41: #{tpu_custom_call.1} parent=31 // pred_check
          %p315 = pneg %p109
        $region42: #{tpu_custom_call.1} parent=31 // pred_check_branch
          %317 = sbr.rel (%p315) target = $region44
        $region43: #{tpu_custom_call.1} parent=31 // pred_region
          %s318 = sand.u32 %s23, 1
          %s319 = scalar_lea.sflag [#allocation9], %s318
          %s320 = sand.u32 %s99, 1
          %s321 = smul.addr %s320, 8
          %s322 = scalar_lea.vmem [#allocation10], %s321
          %s324 = ssub.s32 128, 128
          %325 = vsyncadd %s319, %s324
          %s326 = smul.addr %s30, 128
          %s327 = scalar_lea.hbm %s2, %s326
          %s329 = sshll.u32 %s322, 4
          %s330 = int_to_ptr.vmem [resolvable:$true] %s329
          %332 = dma.hbm_to_vmem [thread:$0]  %s327, 128, %s330, %s319
        $region44: #{tpu_custom_call.1} parent=31 // pred_fallthru
          _
      $region32: #{tpu_custom_call.1} parent=5 // pred_fallthru
        _
      %p333 = scmp.le.s32.totalorder 1, %s23
      %p334 = scmp.lt.s32.totalorder %s23, 3
      %p335 = pnand %p333, %p334
      %p336 = pneg %p335
      // Predicated region
      $region45: #{tpu_custom_call.1} parent=5 // pred_check
        _
      $region46: #{tpu_custom_call.1} parent=5 // pred_check_branch
        %338 = sbr.rel (%p335) target = $region48
      $region47: #{tpu_custom_call.1} parent=5 // pred_region
        %s339 = ssub.s32 %s23, 1
        %s340 = sand.u32 %s50, 1
        %s341 = scalar_lea.sflag [#allocation6], %s340
        %s342 = sand.u32 %s50, 1
        %s343 = smul.addr %s342, 8
        %s344 = scalar_lea.vmem [#allocation5], %s343
        // Predicated region
        $region49: #{tpu_custom_call.1} parent=47 // pred_check
          %p345 = pneg %p63
        $region50: #{tpu_custom_call.1} parent=47 // pred_check_branch
          %347 = sbr.rel (%p345) target = $region52
        $region51: #{tpu_custom_call.1} parent=47 // pred_region
          %348 = dma.done %s341, 128
        $region52: #{tpu_custom_call.1} parent=47 // pred_fallthru
          _
        %s349 = sand.u32 %s28, 1
        %s350 = scalar_lea.sflag [#allocation9], %s349
        %s351 = sand.u32 %s76, 1
        %s352 = smul.addr %s351, 8
        %s353 = scalar_lea.vmem [#allocation8], %s352
        // Predicated region
        $region53: #{tpu_custom_call.1} parent=47 // pred_check
          %p354 = pneg %p89
        $region54: #{tpu_custom_call.1} parent=47 // pred_check_branch
          %356 = sbr.rel (%p354) target = $region56
        $region55: #{tpu_custom_call.1} parent=47 // pred_region
          %357 = dma.done %s350, 128
        $region56: #{tpu_custom_call.1} parent=47 // pred_fallthru
          _
        %s358 = sand.u32 %s28, 1
        %s359 = scalar_lea.sflag [#allocation9], %s358
        %s360 = sand.u32 %s102, 1
        %s361 = smul.addr %s360, 8
        %s362 = scalar_lea.vmem [#allocation10], %s361
        // Predicated region
        $region57: #{tpu_custom_call.1} parent=47 // pred_check
          %p363 = pneg %p115
        $region58: #{tpu_custom_call.1} parent=47 // pred_check_branch
          %365 = sbr.rel (%p363) target = $region60
        $region59: #{tpu_custom_call.1} parent=47 // pred_region
          %366 = dma.done %s359, 128
        $region60: #{tpu_custom_call.1} parent=47 // pred_fallthru
          _
        // Predicated region
        $region61: #{tpu_custom_call.1} parent=47 // pred_check
          %p367 = pneg %p136
        $region62: #{tpu_custom_call.1} parent=47 // pred_check_branch
          %369 = sbr.rel (%p367) target = $region64
        $region63: #{tpu_custom_call.1} parent=47 // pred_region
          %370 = dma.done [#allocation12], 512
        $region64: #{tpu_custom_call.1} parent=47 // pred_fallthru
          _
        // Predicated region
        $region65: #{tpu_custom_call.1} parent=47 // pred_check
          %p371 = pneg %p178
        $region66: #{tpu_custom_call.1} parent=47 // pred_check_branch
          %373 = sbr.rel (%p371) target = $region68
        $region67: #{tpu_custom_call.1} parent=47 // pred_region
          %374 = dma.done [#allocation12], 512
        $region68: #{tpu_custom_call.1} parent=47 // pred_fallthru
          _
        %s375 = sand.u32 %s50, 1
        %s376 = scalar_lea.sflag [#allocation6], %s375
        %s377 = sand.u32 %s50, 1
        %s378 = smul.addr %s377, 8
        %s379 = scalar_lea.vmem [#allocation5], %s378
        %p380 = pneg %p63
        %p381 = pneg %p60
        %s382 = sand.u32 %s28, 1
        %s383 = scalar_lea.sflag [#allocation9], %s382
        %s384 = sand.u32 %s76, 1
        %s385 = smul.addr %s384, 8
        %s386 = scalar_lea.vmem [#allocation8], %s385
        %p387 = pneg %p89
        %p388 = pneg %p86
        %s389 = sand.u32 %s28, 1
        %s390 = scalar_lea.sflag [#allocation9], %s389
        %s391 = sand.u32 %s102, 1
        %s392 = smul.addr %s391, 8
        %s393 = scalar_lea.vmem [#allocation10], %s392
        %p394 = pneg %p115
        %p395 = pneg %p112
        %p396 = pneg %p136
        %p397 = pneg %p133
        %p398 = pneg %p157
        %p399 = pneg %p154
        %p400 = pneg %p178
        %p401 = pneg %p175
        %p402 = pneg %p199
        %p403 = pneg %p196
        %p404 = pneg %p227
        %p405 = pneg %p224
        %s406 = sand.u32 %s214, 1
        %s407 = scalar_lea.sflag [#allocation7], %s406
        %s408 = sand.u32 %s214, 1
        %s409 = smul.addr %s408, 8
        %s410 = scalar_lea.vmem [#allocation14], %s409
        %v411 = vld [vmem:[#allocation11] sm:$0xff]
        %v412 = vld [vmem:[#allocation11 + $0x8] sm:$0xff]
        %v413 = vld [vmem:[#allocation11 + $0x10] sm:$0xff]
        %v414 = vld [vmem:[#allocation11 + $0x18] sm:$0xff]
        %v415 = vld [vmem:[%s4] sm:$0x1]
        %p416 = scmp.eq.s32.totalorder %s33, 0
        // Predicated region
        $region69: #{tpu_custom_call.1} parent=47 // pred_check
          %p417 = pneg %p416
        $region70: #{tpu_custom_call.1} parent=47 // pred_check_branch
          %419 = sbr.rel (%p417) target = $region72
        $region71: #{tpu_custom_call.1} parent=47 // pred_region
          %v420 = vld [vmem:[%s353] sm:$0xff]
          %v421 = vld [vmem:[%s362] sm:$0xff]
          %v423 = vlaneseq
          %v424 = vshrl.u32 %v423, 7
          %v425 = vsub.s32 0, %v424
          %v426 = vrot.slane %v415, %v425
          %431 = vrot.lane.b32.xlu0 %v411, 96
          %v432 = vpop.permute.xlu0 %431
          %433 = vrot.lane.b32.xlu0 %v412, 96
          %v434 = vpop.permute.xlu0 %433
          %435 = vrot.lane.b32.xlu0 %v413, 96
          %v436 = vpop.permute.xlu0 %435
          %437 = vrot.lane.b32.xlu0 %v414, 96
          %v438 = vpop.permute.xlu0 %437
          %443 = vrot.lane.b32.xlu0 %v426, 96
          %v444 = vpop.permute.xlu0 %443
          %vm446 = vcmask 261120
          %v448 = vsel %vm446, %v420, 0
          %450 = vmatprep.subr.mxu0 0.0
          %451 = vmatpush1.msra.mxu0 0.0
          %452 = vmatprep.subr.mxu0 0.0
          %453 = vmatpush1.msra.mxu0 0.0
          %454 = vmatprep.subr.mxu0 0.0
          %455 = vmatpush1.msra.mxu0 0.0
          %456 = vmatprep.subr.mxu0 0.0
          %457 = vmatpush1.msra.mxu0 0.0
          %458 = vmatprep.subr.mxu0 0.0
          %459 = vmatpush1.msra.mxu0 0.0
          %460 = vmatprep.subr.mxu0 0.0
          %461 = vmatpush1.msra.mxu0 0.0
          %462 = vmatprep.subr.mxu0 0.0
          %463 = vmatpush1.msra.mxu0 0.0
          %464 = vmatprep.subr.mxu0 0.0
          %465 = vmatpush1.msra.mxu0 0.0
          %466 = vmatprep.subr.mxu0 0.0
          %467 = vmatpush1.msra.mxu0 0.0
          %468 = vmatprep.subr.mxu0 0.0
          %469 = vmatpush1.msra.mxu0 0.0
          %470 = vmatprep.subr.mxu0 0.0
          %471 = vmatpush1.msra.mxu0 0.0
          %472 = vmatprep.subr.mxu0 0.0
          %473 = vmatpush1.msra.mxu0 0.0
          %474 = vmatprep.subr.mxu0 0.0
          %475 = vmatpush1.msra.mxu0 %v438
          %476 = vmatprep.subr.mxu0 0.0
          %477 = vmatpush1.msra.mxu0 %v436
          %478 = vmatprep.subr.mxu0 0.0
          %479 = vmatpush1.msra.mxu0 %v434
          %480 = vmatprep.subr.mxu0 0.0
          %481 = vmatpush1.msra.mxu0 %v432
          %482 = vmatprep.subr.mxu0 0.0
          %483 = vmatpush2.msra.mxu0 0.0
          %484 = vmatprep.subr.mxu0 0.0
          %485 = vmatpush2.msra.mxu0 0.0
          %486 = vmatprep.subr.mxu0 0.0
          %487 = vmatpush2.msra.mxu0 0.0
          %488 = vmatprep.subr.mxu0 0.0
          %489 = vmatpush2.msra.mxu0 0.0
          %490 = vmatprep.subr.mxu0 0.0
          %491 = vmatpush2.msra.mxu0 0.0
          %492 = vmatprep.subr.mxu0 0.0
          %493 = vmatpush2.msra.mxu0 0.0
          %494 = vmatprep.subr.mxu0 0.0
          %495 = vmatpush2.msra.mxu0 0.0
          %496 = vmatprep.subr.mxu0 0.0
          %497 = vmatpush2.msra.mxu0 0.0
          %498 = vmatprep.subr.mxu0 0.0
          %499 = vmatpush2.msra.mxu0 0.0
          %500 = vmatprep.subr.mxu0 0.0
          %501 = vmatpush2.msra.mxu0 0.0
          %502 = vmatprep.subr.mxu0 0.0
          %503 = vmatpush2.msra.mxu0 0.0
          %504 = vmatprep.subr.mxu0 0.0
          %505 = vmatpush2.msra.mxu0 0.0
          %506 = vmatprep.subr.mxu0 0.0
          %507 = vmatpush2.msra.mxu0 0.0
          %508 = vmatprep.subr.mxu0 0.0
          %509 = vmatpush2.msra.mxu0 0.0
          %510 = vmatprep.subr.mxu0 0.0
          %511 = vmatpush2.msra.mxu0 0.0
          %512 = vmatprep.subr.mxu0 0.0
          %513 = vmatpush2.msra.mxu0 0.0
          %514 = vmatprep.mubr.f32.mxu0 0.0
          %515 = vmatmul.mubr.f32.gmra.mxu0 %v448
          %v516 = vpop.f32.mrf.mxu0
          %v517 = vadd.f32 %v444, %v516
          %v518 = vpop.f32.mrf.mxu0
          %519 = vdwg.mxu0
          %520 = vrot.lane.b32.xlu0 %v411, 64
          %v521 = vpop.permute.xlu0 %520
          %522 = vrot.lane.b32.xlu0 %v412, 64
          %v523 = vpop.permute.xlu0 %522
          %524 = vrot.lane.b32.xlu0 %v413, 64
          %v525 = vpop.permute.xlu0 %524
          %526 = vrot.lane.b32.xlu0 %v414, 64
          %v527 = vpop.permute.xlu0 %526
          %532 = vrot.lane.b32.xlu0 %v426, 64
          %v533 = vpop.permute.xlu0 %532
          %v536 = vsel %vm446, %v421, 0
          %538 = vmatprep.subr.mxu0 0.0
          %539 = vmatpush1.msra.mxu0 0.0
          %540 = vmatprep.subr.mxu0 0.0
          %541 = vmatpush1.msra.mxu0 0.0
          %542 = vmatprep.subr.mxu0 0.0
          %543 = vmatpush1.msra.mxu0 0.0
          %544 = vmatprep.subr.mxu0 0.0
          %545 = vmatpush1.msra.mxu0 0.0
          %546 = vmatprep.subr.mxu0 0.0
          %547 = vmatpush1.msra.mxu0 0.0
          %548 = vmatprep.subr.mxu0 0.0
          %549 = vmatpush1.msra.mxu0 0.0
          %550 = vmatprep.subr.mxu0 0.0
          %551 = vmatpush1.msra.mxu0 0.0
          %552 = vmatprep.subr.mxu0 0.0
          %553 = vmatpush1.msra.mxu0 0.0
          %554 = vmatprep.subr.mxu0 0.0
          %555 = vmatpush1.msra.mxu0 0.0
          %556 = vmatprep.subr.mxu0 0.0
          %557 = vmatpush1.msra.mxu0 0.0
          %558 = vmatprep.subr.mxu0 0.0
          %559 = vmatpush1.msra.mxu0 0.0
          %560 = vmatprep.subr.mxu0 0.0
          %561 = vmatpush1.msra.mxu0 0.0
          %562 = vmatprep.subr.mxu0 0.0
          %563 = vmatpush1.msra.mxu0 %v527
          %564 = vmatprep.subr.mxu0 0.0
          %565 = vmatpush1.msra.mxu0 %v525
          %566 = vmatprep.subr.mxu0 0.0
          %567 = vmatpush1.msra.mxu0 %v523
          %568 = vmatprep.subr.mxu0 0.0
          %569 = vmatpush1.msra.mxu0 %v521
          %570 = vmatprep.subr.mxu0 0.0
          %571 = vmatpush2.msra.mxu0 0.0
          %572 = vmatprep.subr.mxu0 0.0
          %573 = vmatpush2.msra.mxu0 0.0
          %574 = vmatprep.subr.mxu0 0.0
          %575 = vmatpush2.msra.mxu0 0.0
          %576 = vmatprep.subr.mxu0 0.0
          %577 = vmatpush2.msra.mxu0 0.0
          %578 = vmatprep.subr.mxu0 0.0
          %579 = vmatpush2.msra.mxu0 0.0
          %580 = vmatprep.subr.mxu0 0.0
          %581 = vmatpush2.msra.mxu0 0.0
          %582 = vmatprep.subr.mxu0 0.0
          %583 = vmatpush2.msra.mxu0 0.0
          %584 = vmatprep.subr.mxu0 0.0
          %585 = vmatpush2.msra.mxu0 0.0
          %586 = vmatprep.subr.mxu0 0.0
          %587 = vmatpush2.msra.mxu0 0.0
          %588 = vmatprep.subr.mxu0 0.0
          %589 = vmatpush2.msra.mxu0 0.0
          %590 = vmatprep.subr.mxu0 0.0
          %591 = vmatpush2.msra.mxu0 0.0
          %592 = vmatprep.subr.mxu0 0.0
          %593 = vmatpush2.msra.mxu0 0.0
          %594 = vmatprep.subr.mxu0 0.0
          %595 = vmatpush2.msra.mxu0 0.0
          %596 = vmatprep.subr.mxu0 0.0
          %597 = vmatpush2.msra.mxu0 0.0
          %598 = vmatprep.subr.mxu0 0.0
          %599 = vmatpush2.msra.mxu0 0.0
          %600 = vmatprep.subr.mxu0 0.0
          %601 = vmatpush2.msra.mxu0 0.0
          %602 = vmatprep.mubr.f32.mxu0 0.0
          %603 = vmatmul.mubr.f32.gmra.mxu0 %v536
          %v604 = vpop.f32.mrf.mxu0
          %v605 = vadd.f32 %v533, %v604
          %v606 = vpop.f32.mrf.mxu0
          %607 = vdwg.mxu0
          %608 = vst.msk [vmem:[#allocation2] sm:$0xff] %vm446, %v517
          %609 = vst.msk [vmem:[#allocation3] sm:$0xff] %vm446, %v605
        $region72: #{tpu_custom_call.1} parent=47 // pred_fallthru
          _
        %v610 = vld [vmem:[%s344] sm:$0xff]
        %v612 = vlaneseq
        %v613 = vshrl.u32 %v612, 7
        %v614 = vsub.s32 0, %v613
        %v615 = vrot.slane %v415, %v614
        %vm617 = vcmask 261120
        %v619 = vsel %vm617, %v610, 0
        %621 = vmatprep.subr.mxu0 0.0
        %622 = vmatpush1.msra.mxu0 0.0
        %623 = vmatprep.subr.mxu0 0.0
        %624 = vmatpush1.msra.mxu0 0.0
        %625 = vmatprep.subr.mxu0 0.0
        %626 = vmatpush1.msra.mxu0 0.0
        %627 = vmatprep.subr.mxu0 0.0
        %628 = vmatpush1.msra.mxu0 0.0
        %629 = vmatprep.subr.mxu0 0.0
        %630 = vmatpush1.msra.mxu0 0.0
        %631 = vmatprep.subr.mxu0 0.0
        %632 = vmatpush1.msra.mxu0 0.0
        %633 = vmatprep.subr.mxu0 0.0
        %634 = vmatpush1.msra.mxu0 0.0
        %635 = vmatprep.subr.mxu0 0.0
        %636 = vmatpush1.msra.mxu0 0.0
        %637 = vmatprep.subr.mxu0 0.0
        %638 = vmatpush1.msra.mxu0 0.0
        %639 = vmatprep.subr.mxu0 0.0
        %640 = vmatpush1.msra.mxu0 0.0
        %641 = vmatprep.subr.mxu0 0.0
        %642 = vmatpush1.msra.mxu0 0.0
        %643 = vmatprep.subr.mxu0 0.0
        %644 = vmatpush1.msra.mxu0 0.0
        %645 = vmatprep.subr.mxu0 0.0
        %646 = vmatpush1.msra.mxu0 %v414
        %647 = vmatprep.subr.mxu0 0.0
        %648 = vmatpush1.msra.mxu0 %v413
        %649 = vmatprep.subr.mxu0 0.0
        %650 = vmatpush1.msra.mxu0 %v412
        %651 = vmatprep.subr.mxu0 0.0
        %652 = vmatpush1.msra.mxu0 %v411
        %653 = vmatprep.subr.mxu0 0.0
        %654 = vmatpush2.msra.mxu0 0.0
        %655 = vmatprep.subr.mxu0 0.0
        %656 = vmatpush2.msra.mxu0 0.0
        %657 = vmatprep.subr.mxu0 0.0
        %658 = vmatpush2.msra.mxu0 0.0
        %659 = vmatprep.subr.mxu0 0.0
        %660 = vmatpush2.msra.mxu0 0.0
        %661 = vmatprep.subr.mxu0 0.0
        %662 = vmatpush2.msra.mxu0 0.0
        %663 = vmatprep.subr.mxu0 0.0
        %664 = vmatpush2.msra.mxu0 0.0
        %665 = vmatprep.subr.mxu0 0.0
        %666 = vmatpush2.msra.mxu0 0.0
        %667 = vmatprep.subr.mxu0 0.0
        %668 = vmatpush2.msra.mxu0 0.0
        %669 = vmatprep.subr.mxu0 0.0
        %670 = vmatpush2.msra.mxu0 0.0
        %671 = vmatprep.subr.mxu0 0.0
        %672 = vmatpush2.msra.mxu0 0.0
        %673 = vmatprep.subr.mxu0 0.0
        %674 = vmatpush2.msra.mxu0 0.0
        %675 = vmatprep.subr.mxu0 0.0
        %676 = vmatpush2.msra.mxu0 0.0
        %677 = vmatprep.subr.mxu0 0.0
        %678 = vmatpush2.msra.mxu0 0.0
        %679 = vmatprep.subr.mxu0 0.0
        %680 = vmatpush2.msra.mxu0 0.0
        %681 = vmatprep.subr.mxu0 0.0
        %682 = vmatpush2.msra.mxu0 0.0
        %683 = vmatprep.subr.mxu0 0.0
        %684 = vmatpush2.msra.mxu0 0.0
        %685 = vmatprep.mubr.f32.mxu0 0.0
        %686 = vmatmul.mubr.f32.gmra.mxu0 %v619
        %v687 = vpop.f32.mrf.mxu0
        %v688 = vadd.f32 %v615, %v687
        %v689 = vpop.f32.mrf.mxu0
        %690 = vdwg.mxu0
        %v691 = vmul.f32 %v688, 0.35355338
        %v692 = vld [vmem:[#allocation2] sm:$0xff]
        %v693 = vld [vmem:[#allocation3] sm:$0xff]
        %vm694 = vcmask 64512
        %v696 = vsel %vm694, %v691, 0
        %v699 = vsel %vm694, %v692, 0
        %701 = vmatprep.subr.mxu0 0.0
        %702 = vmatpush1.xpose.msra.mxu0 0.0
        %703 = vmatprep.subr.mxu0 0.0
        %704 = vmatpush1.xpose.msra.mxu0 0.0
        %705 = vmatprep.subr.mxu0 0.0
        %706 = vmatpush1.xpose.msra.mxu0 0.0
        %707 = vmatprep.subr.mxu0 0.0
        %708 = vmatpush1.xpose.msra.mxu0 0.0
        %709 = vmatprep.subr.mxu0 0.0
        %710 = vmatpush1.xpose.msra.mxu0 0.0
        %711 = vmatprep.subr.mxu0 0.0
        %712 = vmatpush1.xpose.msra.mxu0 0.0
        %713 = vmatprep.subr.mxu0 0.0
        %714 = vmatpush1.xpose.msra.mxu0 0.0
        %715 = vmatprep.subr.mxu0 0.0
        %716 = vmatpush1.xpose.msra.mxu0 0.0
        %717 = vmatprep.subr.mxu0 0.0
        %718 = vmatpush1.xpose.msra.mxu0 0.0
        %719 = vmatprep.subr.mxu0 0.0
        %720 = vmatpush1.xpose.msra.mxu0 0.0
        %721 = vmatprep.subr.mxu0 0.0
        %722 = vmatpush1.xpose.msra.mxu0 0.0
        %723 = vmatprep.subr.mxu0 0.0
        %724 = vmatpush1.xpose.msra.mxu0 0.0
        %725 = vmatprep.subr.mxu0 0.0
        %726 = vmatpush1.xpose.msra.mxu0 0.0
        %727 = vmatprep.subr.mxu0 0.0
        %728 = vmatpush1.xpose.msra.mxu0 0.0
        %729 = vmatprep.subr.mxu0 0.0
        %730 = vmatpush1.xpose.msra.mxu0 0.0
        %731 = vmatprep.subr.mxu0 0.0
        %732 = vmatpush1.xpose.msra.mxu0 %v699
        %733 = vmatprep.subr.mxu0 0.0
        %734 = vmatpush2.xpose.msra.mxu0 0.0
        %735 = vmatprep.subr.mxu0 0.0
        %736 = vmatpush2.xpose.msra.mxu0 0.0
        %737 = vmatprep.subr.mxu0 0.0
        %738 = vmatpush2.xpose.msra.mxu0 0.0
        %739 = vmatprep.subr.mxu0 0.0
        %740 = vmatpush2.xpose.msra.mxu0 0.0
        %741 = vmatprep.subr.mxu0 0.0
        %742 = vmatpush2.xpose.msra.mxu0 0.0
        %743 = vmatprep.subr.mxu0 0.0
        %744 = vmatpush2.xpose.msra.mxu0 0.0
        %745 = vmatprep.subr.mxu0 0.0
        %746 = vmatpush2.xpose.msra.mxu0 0.0
        %747 = vmatprep.subr.mxu0 0.0
        %748 = vmatpush2.xpose.msra.mxu0 0.0
        %749 = vmatprep.subr.mxu0 0.0
        %750 = vmatpush2.xpose.msra.mxu0 0.0
        %751 = vmatprep.subr.mxu0 0.0
        %752 = vmatpush2.xpose.msra.mxu0 0.0
        %753 = vmatprep.subr.mxu0 0.0
        %754 = vmatpush2.xpose.msra.mxu0 0.0
        %755 = vmatprep.subr.mxu0 0.0
        %756 = vmatpush2.xpose.msra.mxu0 0.0
        %757 = vmatprep.subr.mxu0 0.0
        %758 = vmatpush2.xpose.msra.mxu0 0.0
        %759 = vmatprep.subr.mxu0 0.0
        %760 = vmatpush2.xpose.msra.mxu0 0.0
        %761 = vmatprep.subr.mxu0 0.0
        %762 = vmatpush2.xpose.msra.mxu0 0.0
        %763 = vmatprep.subr.mxu0 0.0
        %764 = vmatpush2.xpose.msra.mxu0 0.0
        %765 = vmatprep.mubr.f32.mxu0 0.0
        %766 = vmatmul.mubr.f32.gmra.mxu0 %v696
        %v767 = vpop.f32.mrf.mxu0
        %v768 = vadd.f32 0.0, %v767
        %v769 = vpop.f32.mrf.mxu0
        %770 = vdwg.mxu0
        %v771 = vsel %vm694, %v768, -inf
        %772 = vmax.xlane.f32.xlu0 %v771
        %v773 = vpop.xlane.xlu0 %772
        %v774 = vsub.f32 %v768, %v773
        %v775 = vmul.f32 %v774, 1.442695
        %v776 = vpow.pop %v775
        %v777 = vsel %vm694, %v776, 0.0
        %778 = vadd.xlane.f32.xlu0 %v777
        %v779 = vpop.xlane.xlu0 %778
        %v780 = vrcp.pop %v779
        %v781 = vmul.f32 %v776, %v780
        %v783 = vsel %vm694, %v781, 0
        %785 = vmatprep.subr.mxu0 0.0
        %786 = vmatpush1.msra.mxu0 0.0
        %787 = vmatprep.subr.mxu0 0.0
        %788 = vmatpush1.msra.mxu0 0.0
        %789 = vmatprep.subr.mxu0 0.0
        %790 = vmatpush1.msra.mxu0 0.0
        %791 = vmatprep.subr.mxu0 0.0
        %792 = vmatpush1.msra.mxu0 0.0
        %793 = vmatprep.subr.mxu0 0.0
        %794 = vmatpush1.msra.mxu0 0.0
        %795 = vmatprep.subr.mxu0 0.0
        %796 = vmatpush1.msra.mxu0 0.0
        %797 = vmatprep.subr.mxu0 0.0
        %798 = vmatpush1.msra.mxu0 0.0
        %799 = vmatprep.subr.mxu0 0.0
        %800 = vmatpush1.msra.mxu0 0.0
        %801 = vmatprep.subr.mxu0 0.0
        %802 = vmatpush1.msra.mxu0 0.0
        %803 = vmatprep.subr.mxu0 0.0
        %804 = vmatpush1.msra.mxu0 0.0
        %805 = vmatprep.subr.mxu0 0.0
        %806 = vmatpush1.msra.mxu0 0.0
        %807 = vmatprep.subr.mxu0 0.0
        %808 = vmatpush1.msra.mxu0 0.0
        %809 = vmatprep.subr.mxu0 0.0
        %810 = vmatpush1.msra.mxu0 0.0
        %811 = vmatprep.subr.mxu0 0.0
        %812 = vmatpush1.msra.mxu0 0.0
        %813 = vmatprep.subr.mxu0 0.0
        %814 = vmatpush1.msra.mxu0 0.0
        %815 = vmatprep.subr.mxu0 0.0
        %816 = vmatpush1.msra.mxu0 %v693
        %817 = vmatprep.subr.mxu0 0.0
        %818 = vmatpush2.msra.mxu0 0.0
        %819 = vmatprep.subr.mxu0 0.0
        %820 = vmatpush2.msra.mxu0 0.0
        %821 = vmatprep.subr.mxu0 0.0
        %822 = vmatpush2.msra.mxu0 0.0
        %823 = vmatprep.subr.mxu0 0.0
        %824 = vmatpush2.msra.mxu0 0.0
        %825 = vmatprep.subr.mxu0 0.0
        %826 = vmatpush2.msra.mxu0 0.0
        %827 = vmatprep.subr.mxu0 0.0
        %828 = vmatpush2.msra.mxu0 0.0
        %829 = vmatprep.subr.mxu0 0.0
        %830 = vmatpush2.msra.mxu0 0.0
        %831 = vmatprep.subr.mxu0 0.0
        %832 = vmatpush2.msra.mxu0 0.0
        %833 = vmatprep.subr.mxu0 0.0
        %834 = vmatpush2.msra.mxu0 0.0
        %835 = vmatprep.subr.mxu0 0.0
        %836 = vmatpush2.msra.mxu0 0.0
        %837 = vmatprep.subr.mxu0 0.0
        %838 = vmatpush2.msra.mxu0 0.0
        %839 = vmatprep.subr.mxu0 0.0
        %840 = vmatpush2.msra.mxu0 0.0
        %841 = vmatprep.subr.mxu0 0.0
        %842 = vmatpush2.msra.mxu0 0.0
        %843 = vmatprep.subr.mxu0 0.0
        %844 = vmatpush2.msra.mxu0 0.0
        %845 = vmatprep.subr.mxu0 0.0
        %846 = vmatpush2.msra.mxu0 0.0
        %847 = vmatprep.subr.mxu0 0.0
        %848 = vmatpush2.msra.mxu0 0.0
        %849 = vmatprep.mubr.f32.mxu0 0.0
        %850 = vmatmul.mubr.f32.gmra.mxu0 %v783
        %v851 = vpop.f32.mrf.mxu0
        %v852 = vadd.f32 0.0, %v851
        %v853 = vpop.f32.mrf.mxu0
        %854 = vdwg.mxu0
        %855 = vst.msk [vmem:[#allocation4] sm:$0xff] %vm694, %v852
        %856 = vrot.lane.b32.xlu0 %v691, 120
        %v857 = vpop.permute.xlu0 %856
        %858 = vrot.lane.b32.xlu0 %v692, 120
        %v859 = vpop.permute.xlu0 %858
        %v860 = vsel %vm694, %v857, 0
        %v862 = vsel %vm694, %v859, 0
        %864 = vmatprep.subr.mxu0 0.0
        %865 = vmatpush1.xpose.msra.mxu0 0.0
        %866 = vmatprep.subr.mxu0 0.0
        %867 = vmatpush1.xpose.msra.mxu0 0.0
        %868 = vmatprep.subr.mxu0 0.0
        %869 = vmatpush1.xpose.msra.mxu0 0.0
        %870 = vmatprep.subr.mxu0 0.0
        %871 = vmatpush1.xpose.msra.mxu0 0.0
        %872 = vmatprep.subr.mxu0 0.0
        %873 = vmatpush1.xpose.msra.mxu0 0.0
        %874 = vmatprep.subr.mxu0 0.0
        %875 = vmatpush1.xpose.msra.mxu0 0.0
        %876 = vmatprep.subr.mxu0 0.0
        %877 = vmatpush1.xpose.msra.mxu0 0.0
        %878 = vmatprep.subr.mxu0 0.0
        %879 = vmatpush1.xpose.msra.mxu0 0.0
        %880 = vmatprep.subr.mxu0 0.0
        %881 = vmatpush1.xpose.msra.mxu0 0.0
        %882 = vmatprep.subr.mxu0 0.0
        %883 = vmatpush1.xpose.msra.mxu0 0.0
        %884 = vmatprep.subr.mxu0 0.0
        %885 = vmatpush1.xpose.msra.mxu0 0.0
        %886 = vmatprep.subr.mxu0 0.0
        %887 = vmatpush1.xpose.msra.mxu0 0.0
        %888 = vmatprep.subr.mxu0 0.0
        %889 = vmatpush1.xpose.msra.mxu0 0.0
        %890 = vmatprep.subr.mxu0 0.0
        %891 = vmatpush1.xpose.msra.mxu0 0.0
        %892 = vmatprep.subr.mxu0 0.0
        %893 = vmatpush1.xpose.msra.mxu0 0.0
        %894 = vmatprep.subr.mxu0 0.0
        %895 = vmatpush1.xpose.msra.mxu0 %v862
        %896 = vmatprep.subr.mxu0 0.0
        %897 = vmatpush2.xpose.msra.mxu0 0.0
        %898 = vmatprep.subr.mxu0 0.0
        %899 = vmatpush2.xpose.msra.mxu0 0.0
        %900 = vmatprep.subr.mxu0 0.0
        %901 = vmatpush2.xpose.msra.mxu0 0.0
        %902 = vmatprep.subr.mxu0 0.0
        %903 = vmatpush2.xpose.msra.mxu0 0.0
        %904 = vmatprep.subr.mxu0 0.0
        %905 = vmatpush2.xpose.msra.mxu0 0.0
        %906 = vmatprep.subr.mxu0 0.0
        %907 = vmatpush2.xpose.msra.mxu0 0.0
        %908 = vmatprep.subr.mxu0 0.0
        %909 = vmatpush2.xpose.msra.mxu0 0.0
        %910 = vmatprep.subr.mxu0 0.0
        %911 = vmatpush2.xpose.msra.mxu0 0.0
        %912 = vmatprep.subr.mxu0 0.0
        %913 = vmatpush2.xpose.msra.mxu0 0.0
        %914 = vmatprep.subr.mxu0 0.0
        %915 = vmatpush2.xpose.msra.mxu0 0.0
        %916 = vmatprep.subr.mxu0 0.0
        %917 = vmatpush2.xpose.msra.mxu0 0.0
        %918 = vmatprep.subr.mxu0 0.0
        %919 = vmatpush2.xpose.msra.mxu0 0.0
        %920 = vmatprep.subr.mxu0 0.0
        %921 = vmatpush2.xpose.msra.mxu0 0.0
        %922 = vmatprep.subr.mxu0 0.0
        %923 = vmatpush2.xpose.msra.mxu0 0.0
        %924 = vmatprep.subr.mxu0 0.0
        %925 = vmatpush2.xpose.msra.mxu0 0.0
        %926 = vmatprep.subr.mxu0 0.0
        %927 = vmatpush2.xpose.msra.mxu0 0.0
        %928 = vmatprep.mubr.f32.mxu0 0.0
        %929 = vmatmul.mubr.f32.gmra.mxu0 %v860
        %v930 = vpop.f32.mrf.mxu0
        %v931 = vadd.f32 0.0, %v930
        %v932 = vpop.f32.mrf.mxu0
        %933 = vdwg.mxu0
        %v934 = vsel %vm694, %v931, -inf
        %935 = vmax.xlane.f32.xlu0 %v934
        %v936 = vpop.xlane.xlu0 %935
        %v937 = vsub.f32 %v931, %v936
        %v938 = vmul.f32 %v937, 1.442695
        %v939 = vpow.pop %v938
        %v940 = vsel %vm694, %v939, 0.0
        %941 = vadd.xlane.f32.xlu0 %v940
        %v942 = vpop.xlane.xlu0 %941
        %v943 = vrcp.pop %v942
        %v944 = vmul.f32 %v939, %v943
        %946 = vrot.lane.b32.xlu0 %v693, 120
        %v947 = vpop.permute.xlu0 %946
        %v950 = vsel %vm694, %v944, 0
        %952 = vmatprep.subr.mxu0 0.0
        %953 = vmatpush1.msra.mxu0 0.0
        %954 = vmatprep.subr.mxu0 0.0
        %955 = vmatpush1.msra.mxu0 0.0
        %956 = vmatprep.subr.mxu0 0.0
        %957 = vmatpush1.msra.mxu0 0.0
        %958 = vmatprep.subr.mxu0 0.0
        %959 = vmatpush1.msra.mxu0 0.0
        %960 = vmatprep.subr.mxu0 0.0
        %961 = vmatpush1.msra.mxu0 0.0
        %962 = vmatprep.subr.mxu0 0.0
        %963 = vmatpush1.msra.mxu0 0.0
        %964 = vmatprep.subr.mxu0 0.0
        %965 = vmatpush1.msra.mxu0 0.0
        %966 = vmatprep.subr.mxu0 0.0
        %967 = vmatpush1.msra.mxu0 0.0
        %968 = vmatprep.subr.mxu0 0.0
        %969 = vmatpush1.msra.mxu0 0.0
        %970 = vmatprep.subr.mxu0 0.0
        %971 = vmatpush1.msra.mxu0 0.0
        %972 = vmatprep.subr.mxu0 0.0
        %973 = vmatpush1.msra.mxu0 0.0
        %974 = vmatprep.subr.mxu0 0.0
        %975 = vmatpush1.msra.mxu0 0.0
        %976 = vmatprep.subr.mxu0 0.0
        %977 = vmatpush1.msra.mxu0 0.0
        %978 = vmatprep.subr.mxu0 0.0
        %979 = vmatpush1.msra.mxu0 0.0
        %980 = vmatprep.subr.mxu0 0.0
        %981 = vmatpush1.msra.mxu0 0.0
        %982 = vmatprep.subr.mxu0 0.0
        %983 = vmatpush1.msra.mxu0 %v947
        %984 = vmatprep.subr.mxu0 0.0
        %985 = vmatpush2.msra.mxu0 0.0
        %986 = vmatprep.subr.mxu0 0.0
        %987 = vmatpush2.msra.mxu0 0.0
        %988 = vmatprep.subr.mxu0 0.0
        %989 = vmatpush2.msra.mxu0 0.0
        %990 = vmatprep.subr.mxu0 0.0
        %991 = vmatpush2.msra.mxu0 0.0
        %992 = vmatprep.subr.mxu0 0.0
        %993 = vmatpush2.msra.mxu0 0.0
        %994 = vmatprep.subr.mxu0 0.0
        %995 = vmatpush2.msra.mxu0 0.0
        %996 = vmatprep.subr.mxu0 0.0
        %997 = vmatpush2.msra.mxu0 0.0
        %998 = vmatprep.subr.mxu0 0.0
        %999 = vmatpush2.msra.mxu0 0.0
        %1000 = vmatprep.subr.mxu0 0.0
        %1001 = vmatpush2.msra.mxu0 0.0
        %1002 = vmatprep.subr.mxu0 0.0
        %1003 = vmatpush2.msra.mxu0 0.0
        %1004 = vmatprep.subr.mxu0 0.0
        %1005 = vmatpush2.msra.mxu0 0.0
        %1006 = vmatprep.subr.mxu0 0.0
        %1007 = vmatpush2.msra.mxu0 0.0
        %1008 = vmatprep.subr.mxu0 0.0
        %1009 = vmatpush2.msra.mxu0 0.0
        %1010 = vmatprep.subr.mxu0 0.0
        %1011 = vmatpush2.msra.mxu0 0.0
        %1012 = vmatprep.subr.mxu0 0.0
        %1013 = vmatpush2.msra.mxu0 0.0
        %1014 = vmatprep.subr.mxu0 0.0
        %1015 = vmatpush2.msra.mxu0 0.0
        %1016 = vmatprep.mubr.f32.mxu0 0.0
        %1017 = vmatmul.mubr.f32.gmra.mxu0 %v950
        %v1018 = vpop.f32.mrf.mxu0
        %v1019 = vadd.f32 0.0, %v1018
        %v1020 = vpop.f32.mrf.mxu0
        %1021 = vdwg.mxu0
        %1023 = vrot.lane.b32.xlu0 %v1019, 8
        %v1024 = vpop.permute.xlu0 %1023
        %vm1026 = vcmask 130112
        %1027 = vst.msk [vmem:[#allocation4] sm:$0xff] %vm1026, %v1024
        %1028 = vrot.lane.b32.xlu0 %v691, 112
        %v1029 = vpop.permute.xlu0 %1028
        %1030 = vrot.lane.b32.xlu0 %v692, 112
        %v1031 = vpop.permute.xlu0 %1030
        %v1032 = vsel %vm694, %v1029, 0
        %v1034 = vsel %vm694, %v1031, 0
        %1036 = vmatprep.subr.mxu0 0.0
        %1037 = vmatpush1.xpose.msra.mxu0 0.0
        %1038 = vmatprep.subr.mxu0 0.0
        %1039 = vmatpush1.xpose.msra.mxu0 0.0
        %1040 = vmatprep.subr.mxu0 0.0
        %1041 = vmatpush1.xpose.msra.mxu0 0.0
        %1042 = vmatprep.subr.mxu0 0.0
        %1043 = vmatpush1.xpose.msra.mxu0 0.0
        %1044 = vmatprep.subr.mxu0 0.0
        %1045 = vmatpush1.xpose.msra.mxu0 0.0
        %1046 = vmatprep.subr.mxu0 0.0
        %1047 = vmatpush1.xpose.msra.mxu0 0.0
        %1048 = vmatprep.subr.mxu0 0.0
        %1049 = vmatpush1.xpose.msra.mxu0 0.0
        %1050 = vmatprep.subr.mxu0 0.0
        %1051 = vmatpush1.xpose.msra.mxu0 0.0
        %1052 = vmatprep.subr.mxu0 0.0
        %1053 = vmatpush1.xpose.msra.mxu0 0.0
        %1054 = vmatprep.subr.mxu0 0.0
        %1055 = vmatpush1.xpose.msra.mxu0 0.0
        %1056 = vmatprep.subr.mxu0 0.0
        %1057 = vmatpush1.xpose.msra.mxu0 0.0
        %1058 = vmatprep.subr.mxu0 0.0
        %1059 = vmatpush1.xpose.msra.mxu0 0.0
        %1060 = vmatprep.subr.mxu0 0.0
        %1061 = vmatpush1.xpose.msra.mxu0 0.0
        %1062 = vmatprep.subr.mxu0 0.0
        %1063 = vmatpush1.xpose.msra.mxu0 0.0
        %1064 = vmatprep.subr.mxu0 0.0
        %1065 = vmatpush1.xpose.msra.mxu0 0.0
        %1066 = vmatprep.subr.mxu0 0.0
        %1067 = vmatpush1.xpose.msra.mxu0 %v1034
        %1068 = vmatprep.subr.mxu0 0.0
        %1069 = vmatpush2.xpose.msra.mxu0 0.0
        %1070 = vmatprep.subr.mxu0 0.0
        %1071 = vmatpush2.xpose.msra.mxu0 0.0
        %1072 = vmatprep.subr.mxu0 0.0
        %1073 = vmatpush2.xpose.msra.mxu0 0.0
        %1074 = vmatprep.subr.mxu0 0.0
        %1075 = vmatpush2.xpose.msra.mxu0 0.0
        %1076 = vmatprep.subr.mxu0 0.0
        %1077 = vmatpush2.xpose.msra.mxu0 0.0
        %1078 = vmatprep.subr.mxu0 0.0
        %1079 = vmatpush2.xpose.msra.mxu0 0.0
        %1080 = vmatprep.subr.mxu0 0.0
        %1081 = vmatpush2.xpose.msra.mxu0 0.0
        %1082 = vmatprep.subr.mxu0 0.0
        %1083 = vmatpush2.xpose.msra.mxu0 0.0
        %1084 = vmatprep.subr.mxu0 0.0
        %1085 = vmatpush2.xpose.msra.mxu0 0.0
        %1086 = vmatprep.subr.mxu0 0.0
        %1087 = vmatpush2.xpose.msra.mxu0 0.0
        %1088 = vmatprep.subr.mxu0 0.0
        %1089 = vmatpush2.xpose.msra.mxu0 0.0
        %1090 = vmatprep.subr.mxu0 0.0
        %1091 = vmatpush2.xpose.msra.mxu0 0.0
        %1092 = vmatprep.subr.mxu0 0.0
        %1093 = vmatpush2.xpose.msra.mxu0 0.0
        %1094 = vmatprep.subr.mxu0 0.0
        %1095 = vmatpush2.xpose.msra.mxu0 0.0
        %1096 = vmatprep.subr.mxu0 0.0
        %1097 = vmatpush2.xpose.msra.mxu0 0.0
        %1098 = vmatprep.subr.mxu0 0.0
        %1099 = vmatpush2.xpose.msra.mxu0 0.0
        %1100 = vmatprep.mubr.f32.mxu0 0.0
        %1101 = vmatmul.mubr.f32.gmra.mxu0 %v1032
        %v1102 = vpop.f32.mrf.mxu0
        %v1103 = vadd.f32 0.0, %v1102
        %v1104 = vpop.f32.mrf.mxu0
        %1105 = vdwg.mxu0
        %v1106 = vsel %vm694, %v1103, -inf
        %1107 = vmax.xlane.f32.xlu0 %v1106
        %v1108 = vpop.xlane.xlu0 %1107
        %v1109 = vsub.f32 %v1103, %v1108
        %v1110 = vmul.f32 %v1109, 1.442695
        %v1111 = vpow.pop %v1110
        %v1112 = vsel %vm694, %v1111, 0.0
        %1113 = vadd.xlane.f32.xlu0 %v1112
        %v1114 = vpop.xlane.xlu0 %1113
        %v1115 = vrcp.pop %v1114
        %v1116 = vmul.f32 %v1111, %v1115
        %1117 = vrot.lane.b32.xlu0 %v693, 112
        %v1118 = vpop.permute.xlu0 %1117
        %v1121 = vsel %vm694, %v1116, 0
        %1123 = vmatprep.subr.mxu0 0.0
        %1124 = vmatpush1.msra.mxu0 0.0
        %1125 = vmatprep.subr.mxu0 0.0
        %1126 = vmatpush1.msra.mxu0 0.0
        %1127 = vmatprep.subr.mxu0 0.0
        %1128 = vmatpush1.msra.mxu0 0.0
        %1129 = vmatprep.subr.mxu0 0.0
        %1130 = vmatpush1.msra.mxu0 0.0
        %1131 = vmatprep.subr.mxu0 0.0
        %1132 = vmatpush1.msra.mxu0 0.0
        %1133 = vmatprep.subr.mxu0 0.0
        %1134 = vmatpush1.msra.mxu0 0.0
        %1135 = vmatprep.subr.mxu0 0.0
        %1136 = vmatpush1.msra.mxu0 0.0
        %1137 = vmatprep.subr.mxu0 0.0
        %1138 = vmatpush1.msra.mxu0 0.0
        %1139 = vmatprep.subr.mxu0 0.0
        %1140 = vmatpush1.msra.mxu0 0.0
        %1141 = vmatprep.subr.mxu0 0.0
        %1142 = vmatpush1.msra.mxu0 0.0
        %1143 = vmatprep.subr.mxu0 0.0
        %1144 = vmatpush1.msra.mxu0 0.0
        %1145 = vmatprep.subr.mxu0 0.0
        %1146 = vmatpush1.msra.mxu0 0.0
        %1147 = vmatprep.subr.mxu0 0.0
        %1148 = vmatpush1.msra.mxu0 0.0
        %1149 = vmatprep.subr.mxu0 0.0
        %1150 = vmatpush1.msra.mxu0 0.0
        %1151 = vmatprep.subr.mxu0 0.0
        %1152 = vmatpush1.msra.mxu0 0.0
        %1153 = vmatprep.subr.mxu0 0.0
        %1154 = vmatpush1.msra.mxu0 %v1118
        %1155 = vmatprep.subr.mxu0 0.0
        %1156 = vmatpush2.msra.mxu0 0.0
        %1157 = vmatprep.subr.mxu0 0.0
        %1158 = vmatpush2.msra.mxu0 0.0
        %1159 = vmatprep.subr.mxu0 0.0
        %1160 = vmatpush2.msra.mxu0 0.0
        %1161 = vmatprep.subr.mxu0 0.0
        %1162 = vmatpush2.msra.mxu0 0.0
        %1163 = vmatprep.subr.mxu0 0.0
        %1164 = vmatpush2.msra.mxu0 0.0
        %1165 = vmatprep.subr.mxu0 0.0
        %1166 = vmatpush2.msra.mxu0 0.0
        %1167 = vmatprep.subr.mxu0 0.0
        %1168 = vmatpush2.msra.mxu0 0.0
        %1169 = vmatprep.subr.mxu0 0.0
        %1170 = vmatpush2.msra.mxu0 0.0
        %1171 = vmatprep.subr.mxu0 0.0
        %1172 = vmatpush2.msra.mxu0 0.0
        %1173 = vmatprep.subr.mxu0 0.0
        %1174 = vmatpush2.msra.mxu0 0.0
        %1175 = vmatprep.subr.mxu0 0.0
        %1176 = vmatpush2.msra.mxu0 0.0
        %1177 = vmatprep.subr.mxu0 0.0
        %1178 = vmatpush2.msra.mxu0 0.0
        %1179 = vmatprep.subr.mxu0 0.0
        %1180 = vmatpush2.msra.mxu0 0.0
        %1181 = vmatprep.subr.mxu0 0.0
        %1182 = vmatpush2.msra.mxu0 0.0
        %1183 = vmatprep.subr.mxu0 0.0
        %1184 = vmatpush2.msra.mxu0 0.0
        %1185 = vmatprep.subr.mxu0 0.0
        %1186 = vmatpush2.msra.mxu0 0.0
        %1187 = vmatprep.mubr.f32.mxu0 0.0
        %1188 = vmatmul.mubr.f32.gmra.mxu0 %v1121
        %v1189 = vpop.f32.mrf.mxu0
        %v1190 = vadd.f32 0.0, %v1189
        %v1191 = vpop.f32.mrf.mxu0
        %1192 = vdwg.mxu0
        %1194 = vrot.lane.b32.xlu0 %v1190, 16
        %v1195 = vpop.permute.xlu0 %1194
        %vm1197 = vcmask 195712
        %1198 = vst.msk [vmem:[#allocation4] sm:$0xff] %vm1197, %v1195
        %1199 = vrot.lane.b32.xlu0 %v691, 104
        %v1200 = vpop.permute.xlu0 %1199
        %1201 = vrot.lane.b32.xlu0 %v692, 104
        %v1202 = vpop.permute.xlu0 %1201
        %v1203 = vsel %vm694, %v1200, 0
        %v1205 = vsel %vm694, %v1202, 0
        %1207 = vmatprep.subr.mxu0 0.0
        %1208 = vmatpush1.xpose.msra.mxu0 0.0
        %1209 = vmatprep.subr.mxu0 0.0
        %1210 = vmatpush1.xpose.msra.mxu0 0.0
        %1211 = vmatprep.subr.mxu0 0.0
        %1212 = vmatpush1.xpose.msra.mxu0 0.0
        %1213 = vmatprep.subr.mxu0 0.0
        %1214 = vmatpush1.xpose.msra.mxu0 0.0
        %1215 = vmatprep.subr.mxu0 0.0
        %1216 = vmatpush1.xpose.msra.mxu0 0.0
        %1217 = vmatprep.subr.mxu0 0.0
        %1218 = vmatpush1.xpose.msra.mxu0 0.0
        %1219 = vmatprep.subr.mxu0 0.0
        %1220 = vmatpush1.xpose.msra.mxu0 0.0
        %1221 = vmatprep.subr.mxu0 0.0
        %1222 = vmatpush1.xpose.msra.mxu0 0.0
        %1223 = vmatprep.subr.mxu0 0.0
        %1224 = vmatpush1.xpose.msra.mxu0 0.0
        %1225 = vmatprep.subr.mxu0 0.0
        %1226 = vmatpush1.xpose.msra.mxu0 0.0
        %1227 = vmatprep.subr.mxu0 0.0
        %1228 = vmatpush1.xpose.msra.mxu0 0.0
        %1229 = vmatprep.subr.mxu0 0.0
        %1230 = vmatpush1.xpose.msra.mxu0 0.0
        %1231 = vmatprep.subr.mxu0 0.0
        %1232 = vmatpush1.xpose.msra.mxu0 0.0
        %1233 = vmatprep.subr.mxu0 0.0
        %1234 = vmatpush1.xpose.msra.mxu0 0.0
        %1235 = vmatprep.subr.mxu0 0.0
        %1236 = vmatpush1.xpose.msra.mxu0 0.0
        %1237 = vmatprep.subr.mxu0 0.0
        %1238 = vmatpush1.xpose.msra.mxu0 %v1205
        %1239 = vmatprep.subr.mxu0 0.0
        %1240 = vmatpush2.xpose.msra.mxu0 0.0
        %1241 = vmatprep.subr.mxu0 0.0
        %1242 = vmatpush2.xpose.msra.mxu0 0.0
        %1243 = vmatprep.subr.mxu0 0.0
        %1244 = vmatpush2.xpose.msra.mxu0 0.0
        %1245 = vmatprep.subr.mxu0 0.0
        %1246 = vmatpush2.xpose.msra.mxu0 0.0
        %1247 = vmatprep.subr.mxu0 0.0
        %1248 = vmatpush2.xpose.msra.mxu0 0.0
        %1249 = vmatprep.subr.mxu0 0.0
        %1250 = vmatpush2.xpose.msra.mxu0 0.0
        %1251 = vmatprep.subr.mxu0 0.0
        %1252 = vmatpush2.xpose.msra.mxu0 0.0
        %1253 = vmatprep.subr.mxu0 0.0
        %1254 = vmatpush2.xpose.msra.mxu0 0.0
        %1255 = vmatprep.subr.mxu0 0.0
        %1256 = vmatpush2.xpose.msra.mxu0 0.0
        %1257 = vmatprep.subr.mxu0 0.0
        %1258 = vmatpush2.xpose.msra.mxu0 0.0
        %1259 = vmatprep.subr.mxu0 0.0
        %1260 = vmatpush2.xpose.msra.mxu0 0.0
        %1261 = vmatprep.subr.mxu0 0.0
        %1262 = vmatpush2.xpose.msra.mxu0 0.0
        %1263 = vmatprep.subr.mxu0 0.0
        %1264 = vmatpush2.xpose.msra.mxu0 0.0
        %1265 = vmatprep.subr.mxu0 0.0
        %1266 = vmatpush2.xpose.msra.mxu0 0.0
        %1267 = vmatprep.subr.mxu0 0.0
        %1268 = vmatpush2.xpose.msra.mxu0 0.0
        %1269 = vmatprep.subr.mxu0 0.0
        %1270 = vmatpush2.xpose.msra.mxu0 0.0
        %1271 = vmatprep.mubr.f32.mxu0 0.0
        %1272 = vmatmul.mubr.f32.gmra.mxu0 %v1203
        %v1273 = vpop.f32.mrf.mxu0
        %v1274 = vadd.f32 0.0, %v1273
        %v1275 = vpop.f32.mrf.mxu0
        %1276 = vdwg.mxu0
        %v1277 = vsel %vm694, %v1274, -inf
        %1278 = vmax.xlane.f32.xlu0 %v1277
        %v1279 = vpop.xlane.xlu0 %1278
        %v1280 = vsub.f32 %v1274, %v1279
        %v1281 = vmul.f32 %v1280, 1.442695
        %v1282 = vpow.pop %v1281
        %v1283 = vsel %vm694, %v1282, 0.0
        %1284 = vadd.xlane.f32.xlu0 %v1283
        %v1285 = vpop.xlane.xlu0 %1284
        %v1286 = vrcp.pop %v1285
        %v1287 = vmul.f32 %v1282, %v1286
        %1288 = vrot.lane.b32.xlu0 %v693, 104
        %v1289 = vpop.permute.xlu0 %1288
        %v1292 = vsel %vm694, %v1287, 0
        %1294 = vmatprep.subr.mxu0 0.0
        %1295 = vmatpush1.msra.mxu0 0.0
        %1296 = vmatprep.subr.mxu0 0.0
        %1297 = vmatpush1.msra.mxu0 0.0
        %1298 = vmatprep.subr.mxu0 0.0
        %1299 = vmatpush1.msra.mxu0 0.0
        %1300 = vmatprep.subr.mxu0 0.0
        %1301 = vmatpush1.msra.mxu0 0.0
        %1302 = vmatprep.subr.mxu0 0.0
        %1303 = vmatpush1.msra.mxu0 0.0
        %1304 = vmatprep.subr.mxu0 0.0
        %1305 = vmatpush1.msra.mxu0 0.0
        %1306 = vmatprep.subr.mxu0 0.0
        %1307 = vmatpush1.msra.mxu0 0.0
        %1308 = vmatprep.subr.mxu0 0.0
        %1309 = vmatpush1.msra.mxu0 0.0
        %1310 = vmatprep.subr.mxu0 0.0
        %1311 = vmatpush1.msra.mxu0 0.0
        %1312 = vmatprep.subr.mxu0 0.0
        %1313 = vmatpush1.msra.mxu0 0.0
        %1314 = vmatprep.subr.mxu0 0.0
        %1315 = vmatpush1.msra.mxu0 0.0
        %1316 = vmatprep.subr.mxu0 0.0
        %1317 = vmatpush1.msra.mxu0 0.0
        %1318 = vmatprep.subr.mxu0 0.0
        %1319 = vmatpush1.msra.mxu0 0.0
        %1320 = vmatprep.subr.mxu0 0.0
        %1321 = vmatpush1.msra.mxu0 0.0
        %1322 = vmatprep.subr.mxu0 0.0
        %1323 = vmatpush1.msra.mxu0 0.0
        %1324 = vmatprep.subr.mxu0 0.0
        %1325 = vmatpush1.msra.mxu0 %v1289
        %1326 = vmatprep.subr.mxu0 0.0
        %1327 = vmatpush2.msra.mxu0 0.0
        %1328 = vmatprep.subr.mxu0 0.0
        %1329 = vmatpush2.msra.mxu0 0.0
        %1330 = vmatprep.subr.mxu0 0.0
        %1331 = vmatpush2.msra.mxu0 0.0
        %1332 = vmatprep.subr.mxu0 0.0
        %1333 = vmatpush2.msra.mxu0 0.0
        %1334 = vmatprep.subr.mxu0 0.0
        %1335 = vmatpush2.msra.mxu0 0.0
        %1336 = vmatprep.subr.mxu0 0.0
        %1337 = vmatpush2.msra.mxu0 0.0
        %1338 = vmatprep.subr.mxu0 0.0
        %1339 = vmatpush2.msra.mxu0 0.0
        %1340 = vmatprep.subr.mxu0 0.0
        %1341 = vmatpush2.msra.mxu0 0.0
        %1342 = vmatprep.subr.mxu0 0.0
        %1343 = vmatpush2.msra.mxu0 0.0
        %1344 = vmatprep.subr.mxu0 0.0
        %1345 = vmatpush2.msra.mxu0 0.0
        %1346 = vmatprep.subr.mxu0 0.0
        %1347 = vmatpush2.msra.mxu0 0.0
        %1348 = vmatprep.subr.mxu0 0.0
        %1349 = vmatpush2.msra.mxu0 0.0
        %1350 = vmatprep.subr.mxu0 0.0
        %1351 = vmatpush2.msra.mxu0 0.0
        %1352 = vmatprep.subr.mxu0 0.0
        %1353 = vmatpush2.msra.mxu0 0.0
        %1354 = vmatprep.subr.mxu0 0.0
        %1355 = vmatpush2.msra.mxu0 0.0
        %1356 = vmatprep.subr.mxu0 0.0
        %1357 = vmatpush2.msra.mxu0 0.0
        %1358 = vmatprep.mubr.f32.mxu0 0.0
        %1359 = vmatmul.mubr.f32.gmra.mxu0 %v1292
        %v1360 = vpop.f32.mrf.mxu0
        %v1361 = vadd.f32 0.0, %v1360
        %v1362 = vpop.f32.mrf.mxu0
        %1363 = vdwg.mxu0
        %1365 = vrot.lane.b32.xlu0 %v1361, 24
        %v1366 = vpop.permute.xlu0 %1365
        %vm1368 = vcmask 261312
        %1369 = vst.msk [vmem:[#allocation4] sm:$0xff] %vm1368, %v1366
        %v1370 = vld [vmem:[#allocation4] sm:$0xff]
        %v1371 = vld [vmem:[#allocation13] sm:$0xff]
        %v1372 = vld [vmem:[#allocation13 + $0x8] sm:$0xff]
        %v1373 = vld [vmem:[#allocation13 + $0x10] sm:$0xff]
        %v1374 = vld [vmem:[#allocation13 + $0x18] sm:$0xff]
        %v1375 = vld [vmem:[%s6] sm:$0x1]
        %v1377 = vlaneseq
        %v1378 = vshrl.u32 %v1377, 7
        %v1379 = vsub.s32 0, %v1378
        %v1380 = vrot.slane %v1375, %v1379
        %v1383 = vsel %vm617, %v1370, 0
        %1385 = vmatprep.subr.mxu0 0.0
        %1386 = vmatpush1.msra.mxu0 0.0
        %1387 = vmatprep.subr.mxu0 0.0
        %1388 = vmatpush1.msra.mxu0 0.0
        %1389 = vmatprep.subr.mxu0 0.0
        %1390 = vmatpush1.msra.mxu0 0.0
        %1391 = vmatprep.subr.mxu0 0.0
        %1392 = vmatpush1.msra.mxu0 0.0
        %1393 = vmatprep.subr.mxu0 0.0
        %1394 = vmatpush1.msra.mxu0 0.0
        %1395 = vmatprep.subr.mxu0 0.0
        %1396 = vmatpush1.msra.mxu0 0.0
        %1397 = vmatprep.subr.mxu0 0.0
        %1398 = vmatpush1.msra.mxu0 0.0
        %1399 = vmatprep.subr.mxu0 0.0
        %1400 = vmatpush1.msra.mxu0 0.0
        %1401 = vmatprep.subr.mxu0 0.0
        %1402 = vmatpush1.msra.mxu0 0.0
        %1403 = vmatprep.subr.mxu0 0.0
        %1404 = vmatpush1.msra.mxu0 0.0
        %1405 = vmatprep.subr.mxu0 0.0
        %1406 = vmatpush1.msra.mxu0 0.0
        %1407 = vmatprep.subr.mxu0 0.0
        %1408 = vmatpush1.msra.mxu0 0.0
        %1409 = vmatprep.subr.mxu0 0.0
        %1410 = vmatpush1.msra.mxu0 %v1374
        %1411 = vmatprep.subr.mxu0 0.0
        %1412 = vmatpush1.msra.mxu0 %v1373
        %1413 = vmatprep.subr.mxu0 0.0
        %1414 = vmatpush1.msra.mxu0 %v1372
        %1415 = vmatprep.subr.mxu0 0.0
        %1416 = vmatpush1.msra.mxu0 %v1371
        %1417 = vmatprep.subr.mxu0 0.0
        %1418 = vmatpush2.msra.mxu0 0.0
        %1419 = vmatprep.subr.mxu0 0.0
        %1420 = vmatpush2.msra.mxu0 0.0
        %1421 = vmatprep.subr.mxu0 0.0
        %1422 = vmatpush2.msra.mxu0 0.0
        %1423 = vmatprep.subr.mxu0 0.0
        %1424 = vmatpush2.msra.mxu0 0.0
        %1425 = vmatprep.subr.mxu0 0.0
        %1426 = vmatpush2.msra.mxu0 0.0
        %1427 = vmatprep.subr.mxu0 0.0
        %1428 = vmatpush2.msra.mxu0 0.0
        %1429 = vmatprep.subr.mxu0 0.0
        %1430 = vmatpush2.msra.mxu0 0.0
        %1431 = vmatprep.subr.mxu0 0.0
        %1432 = vmatpush2.msra.mxu0 0.0
        %1433 = vmatprep.subr.mxu0 0.0
        %1434 = vmatpush2.msra.mxu0 0.0
        %1435 = vmatprep.subr.mxu0 0.0
        %1436 = vmatpush2.msra.mxu0 0.0
        %1437 = vmatprep.subr.mxu0 0.0
        %1438 = vmatpush2.msra.mxu0 0.0
        %1439 = vmatprep.subr.mxu0 0.0
        %1440 = vmatpush2.msra.mxu0 0.0
        %1441 = vmatprep.subr.mxu0 0.0
        %1442 = vmatpush2.msra.mxu0 0.0
        %1443 = vmatprep.subr.mxu0 0.0
        %1444 = vmatpush2.msra.mxu0 0.0
        %1445 = vmatprep.subr.mxu0 0.0
        %1446 = vmatpush2.msra.mxu0 0.0
        %1447 = vmatprep.subr.mxu0 0.0
        %1448 = vmatpush2.msra.mxu0 0.0
        %1449 = vmatprep.mubr.f32.mxu0 0.0
        %1450 = vmatmul.mubr.f32.gmra.mxu0 %v1383
        %v1451 = vpop.f32.mrf.mxu0
        %v1452 = vadd.f32 %v1380, %v1451
        %v1453 = vpop.f32.mrf.mxu0
        %1454 = vdwg.mxu0
        %1455 = vst.msk [vmem:[%s410] sm:$0xff] %vm617, %v1452
        %s1456 = sand.u32 %s214, 1
        %s1457 = scalar_lea.sflag [#allocation7], %s1456
        %s1458 = sand.u32 %s214, 1
        %s1459 = smul.addr %s1458, 8
        %s1460 = scalar_lea.vmem [#allocation14], %s1459
        // Predicated region
        $region73: #{tpu_custom_call.1} parent=47 // pred_check
          %p1461 = pneg %p224
        $region74: #{tpu_custom_call.1} parent=47 // pred_check_branch
          %1463 = sbr.rel (%p1461) target = $region76
        $region75: #{tpu_custom_call.1} parent=47 // pred_region
          %s1465 = ssub.s32 128, 128
          %1466 = vsyncadd %s1457, %s1465
          %s1467 = sadd.s32 %s33, %s32
          %s1468 = smul.addr %s1467, 128
          %s1469 = scalar_lea.hbm %s7, %s1468
          %s1471 = sshll.u32 %s1460, 4
          %s1472 = int_to_ptr.vmem [resolvable:$true] %s1471
          %1474 = dma.vmem_to_hbm [thread:$0]  %s1472, 128, %s1469, %s1457
        $region76: #{tpu_custom_call.1} parent=47 // pred_fallthru
          _
      $region48: #{tpu_custom_call.1} parent=5 // pred_fallthru
        _
      %p1475 = scmp.le.s32.totalorder 2, %s23
      // Predicated region
      $region77: #{tpu_custom_call.1} parent=5 // pred_check
        %p1476 = pneg %p1475
      $region78: #{tpu_custom_call.1} parent=5 // pred_check_branch
        %1478 = sbr.rel (%p1476) target = $region80
      $region79: #{tpu_custom_call.1} parent=5 // pred_region
        %s1479 = ssub.s32 %s23, 2
        // Predicated region
        $region81: #{tpu_custom_call.1} parent=79 // pred_check
          %p1480 = pneg %p230
        $region82: #{tpu_custom_call.1} parent=79 // pred_check_branch
          %1482 = sbr.rel (%p1480) target = $region84
        $region83: #{tpu_custom_call.1} parent=79 // pred_region
          %s1483 = sand.u32 %s215, 1
          %s1484 = scalar_lea.sflag [#allocation7], %s1483
          %s1485 = sand.u32 %s215, 1
          %s1486 = smul.addr %s1485, 8
          %s1487 = scalar_lea.vmem [#allocation14], %s1486
          %1488 = dma.done %s1484, 128
        $region84: #{tpu_custom_call.1} parent=79 // pred_fallthru
          _
      $region80: #{tpu_custom_call.1} parent=5 // pred_fallthru
        _
    $region6: #{tpu_custom_call.1} parent=1 // loop_footer
      %s27 = sadd.s32 1, %s23
    $region7: #{tpu_custom_call.1} parent=1 // loop_footer_branch
      %22 = sbr.rel target = $region3
    $region8: #{tpu_custom_call.1} parent=1 // loop_exit
      _
    %1489 = vsyncpa [#allocation6], 1
    %s1490 = scalar_lea.sflag [#allocation6], 1
    %1491 = vsyncpa %s1490, 1
    %1492 = vsyncpa [#allocation9], 1
    %s1493 = scalar_lea.sflag [#allocation9], 1
    %1494 = vsyncpa %s1493, 1
    %1495 = vsyncpa [#allocation12], 1
    %1496 = vsyncpa [#allocation7], 1
    %s1497 = scalar_lea.sflag [#allocation7], 1
    %1498 = vsyncpa %s1497, 1

</llo_original>
